<compile_context>
chip_gen: v5e
topology: v5e:2x2
jax: 0.10.0
libtpu: 0.0.40
codegen_flags: <defaults>
</compile_context>

<pallas_src>
import functools

import jax
import jax.numpy as jnp
import numpy as np
from jax.experimental import pallas as pl
from jax.experimental.pallas import tpu as pltpu


def _round_up(x, m):
    return (x + m - 1) // m * m


# -----------------------------------------------------------------------------
# Pallas kernel: one batch element per grid step, (rows=T*V, channels) layout.
#   x_ref   : (1, T*V, C)          input block (channels-last, flattened rows)
#   we_ref  : (C, Ci)              expand weight (BN folded; f32 or bf16)
#   be_ref  : (1, Ci)              expand bias   (f32)
#   wd_ref  : (K, Ci)              depthwise weight (BN folded; f32)
#   bd_ref  : (1, Ci)              depthwise bias (f32)
#   wp_ref  : (Ci, C)              point weight (BN folded; f32 or bf16)
#   bp_ref  : (1, C)               point bias (f32)
#   o_ref   : (1, T*V, C)          output block
#   xpad_ref: (rows_pad, Ci) VMEM  zero-padded expand activations (persistent)
# -----------------------------------------------------------------------------
def _tsl_kernel(x_ref, we_ref, be_ref, wd_ref, bd_ref, wp_ref, bp_ref,
                o_ref, xpad_ref, *, T, V, pad):
    TV = T * V
    Ci = we_ref.shape[1]
    K = wd_ref.shape[0]
    off = _round_up(pad * V, 8)            # sublane-aligned body offset
    rows_pad = xpad_ref.shape[0]
    mm_dtype = we_ref.dtype                # f32 or bf16 matmul path

    # ---- zero halo rows once; scratch persists across grid steps and the
    #      halos are never overwritten afterwards (only [off, off+TV) is) ----
    @pl.when(pl.program_id(0) == 0)
    def _():
        xpad_ref[pl.ds(0, off), :] = jnp.zeros((off, Ci), jnp.float32)
        bot = rows_pad - off - TV
        xpad_ref[pl.ds(off + TV, bot), :] = jnp.zeros((bot, Ci), jnp.float32)

    # ---- expand_conv: shared-weight 1x1 conv (+folded BN) + ReLU ----------
    # (T*V, C) @ (C, Ci) on the MXU, f32 accumulation.
    xe = jnp.dot(x_ref[0].astype(mm_dtype), we_ref[...],
                 preferred_element_type=jnp.float32)
    xe = jnp.maximum(xe + be_ref[...], 0.0)              # (TV, Ci) f32

    # single aligned body store (off is a multiple of 8)
    xpad_ref[pl.ds(off, TV), :] = xe

    # ---- depth_conv: depthwise (K,1) conv along T (+folded BN) + ReLU -----
    # In (t*V + v) row order a shift of one step in T is a shift of V rows,
    # so tap k reads a static-offset (TV, Ci) slice of the padded scratch.
    wd = wd_ref[...]                                     # (K, Ci) hoisted
    bd = bd_ref[...]
    base = off - pad * V
    acc = xpad_ref[pl.ds(base, TV), :] * wd[0]
    for k in range(1, K):                                # static unroll, K small
        acc = acc + xpad_ref[pl.ds(base + k * V, TV), :] * wd[k]
    xd = jnp.maximum(acc + bd, 0.0)                      # (TV, Ci) f32

    # ---- point_conv (+folded BN) + identity residual ----------------------
    xp = jnp.dot(xd.astype(mm_dtype), wp_ref[...],
                 preferred_element_type=jnp.float32)
    # re-read the resident VMEM input block for the residual (short live range)
    o_ref[0] = (xp + bp_ref[...] + x_ref[0]).astype(o_ref.dtype)


# -----------------------------------------------------------------------------
# Wrappers
# -----------------------------------------------------------------------------
def temporal_sep_layer_flat(x_flat, kparams, *, V):
    """x_flat: (N, T*V, C) float32 channels-last flattened rows. Same layout out."""
    we, be, wd, bd, wp, bp = kparams
    N, TV, C = x_flat.shape
    assert TV % V == 0
    T = TV // V
    Ci = we.shape[1]
    K = wd.shape[0]
    pad = (K - 1) // 2
    # Implemented config: stride=1, expand_ratio>0, identity residual (Cin==Cout).
    assert we.shape == (C, Ci) and wp.shape == (Ci, C), (
        "identity residual path requires Cin == Cout and expand_ratio > 0")

    off = _round_up(pad * V, 8)
    rows_pad = _round_up(off + TV + pad * V, 8)

    # Scoped-VMEM budget from actual block/scratch sizes (+ headroom).
    w_item = jnp.dtype(we.dtype).itemsize
    xblk = TV * C * 4
    wbytes = (C * Ci + Ci * C) * w_item + (K * Ci + 2 * Ci + C) * 4
    scratch_bytes = rows_pad * Ci * 4
    vmem_limit = int(2 * xblk + 2 * xblk          # in/out, double-buffered
                     + 2 * wbytes                 # weights, double-buffered
                     + scratch_bytes
                     + (8 << 20))                 # layout/internal headroom

    kernel = functools.partial(_tsl_kernel, T=T, V=V, pad=pad)
    return pl.pallas_call(
        kernel,
        out_shape=jax.ShapeDtypeStruct((N, TV, C), jnp.float32),
        grid_spec=pltpu.PrefetchScalarGridSpec(
            num_scalar_prefetch=0,
            grid=(N,),
            in_specs=[
                pl.BlockSpec((1, TV, C), lambda n: (n, 0, 0)),   # x rows
                pl.BlockSpec((C, Ci),    lambda n: (0, 0)),      # expand W
                pl.BlockSpec((1, Ci),    lambda n: (0, 0)),      # expand b
                pl.BlockSpec((K, Ci),    lambda n: (0, 0)),      # depth  W
                pl.BlockSpec((1, Ci),    lambda n: (0, 0)),      # depth  b
                pl.BlockSpec((Ci, C),    lambda n: (0, 0)),      # point  W
                pl.BlockSpec((1, C),     lambda n: (0, 0)),      # point  b
            ],
            out_specs=pl.BlockSpec((1, TV, C), lambda n: (n, 0, 0)),
            scratch_shapes=[pltpu.VMEM((rows_pad, Ci), jnp.float32)],
        ),
        compiler_params=pltpu.CompilerParams(
            dimension_semantics=("parallel",),
            vmem_limit_bytes=vmem_limit),
    )(x_flat, we, be, wd, bd, wp, bp)


def temporal_sep_layer(x_nchw, kparams):
    """Convenience NCHW entry point: x (N, C, T, V) -> (N, C, T, V).

    NOTE: the two transposes are full extra HBM passes; a channels-last model
    should call temporal_sep_layer_flat directly and skip them."""
    N, C, T, V = x_nchw.shape
    x_flat = jnp.transpose(x_nchw, (0, 2, 3, 1)).reshape(N, T * V, C)
    out = temporal_sep_layer_flat(x_flat.astype(jnp.float32), kparams, V=V)
    return jnp.transpose(out.reshape(N, T, V, C), (0, 3, 1, 2))


# -----------------------------------------------------------------------------
# Host-side parameters: deterministic init + BatchNorm folding (inference mode),
# then the kernel-layout forms (shared channel weights, row-vector biases).
# -----------------------------------------------------------------------------
def make_params(key, C, expand_ratio, K, eps=1e-5):
    Ci = C * expand_ratio
    ks = jax.random.split(key, 12)

    def bn_fold(kg, kb, km, kv, n):
        gamma = 1.0 + 0.1 * jax.random.normal(kg, (n,), jnp.float32)
        beta = 0.1 * jax.random.normal(kb, (n,), jnp.float32)
        mean = 0.1 * jax.random.normal(km, (n,), jnp.float32)
        var = 1.0 + 0.1 * jax.random.uniform(kv, (n,), jnp.float32)
        scale = gamma / jnp.sqrt(var + eps)
        shift = beta - mean * scale
        return scale, shift

    # expand 1x1 conv: torch weight (Ci, C, 1, 1) -> matmul form (C, Ci)
    we_raw = 0.2 * jax.random.normal(ks[0], (C, Ci), jnp.float32)
    be_raw = 0.1 * jax.random.normal(ks[1], (Ci,), jnp.float32)
    se, he = bn_fold(ks[2], ks[3], ks[4], ks[5], Ci)
    we = we_raw * se[None, :]
    be = be_raw * se + he                                    # (Ci,)

    # depthwise conv: torch weight (Ci, 1, K, 1) -> (K, Ci)
    wd_raw = 0.2 * jax.random.normal(ks[6], (K, Ci), jnp.float32)
    bd_raw = 0.1 * jax.random.normal(ks[7], (Ci,), jnp.float32)
    sd, hd = bn_fold(ks[8], ks[9], ks[10], ks[11], Ci)
    wd = wd_raw * sd[None, :]
    bd = bd_raw * sd + hd                                    # (Ci,)

    kp = jax.random.split(jax.random.fold_in(key, 7), 6)
    # pointwise 1x1 conv: torch weight (C, Ci, 1, 1) -> matmul form (Ci, C)
    wp_raw = 0.2 * jax.random.normal(kp[0], (Ci, C), jnp.float32)
    bp_raw = 0.1 * jax.random.normal(kp[1], (C,), jnp.float32)
    sp, hp = bn_fold(kp[2], kp[3], kp[4], kp[5], C)
    wp = wp_raw * sp[None, :]
    bp = bp_raw * sp + hp                                    # (C,)

    return we, be, wd, bd, wp, bp


def make_kernel_params(folded, matmul_dtype=jnp.float32):
    """Kernel-layout params.  matmul_dtype=bf16 enables the v6e/v7x MXU path
    (f32 accumulation and f32 depthwise/residual math are kept in-kernel)."""
    we, be, wd, bd, wp, bp = folded
    return (we.astype(matmul_dtype), be[None, :],
            wd, bd[None, :],
            wp.astype(matmul_dtype), bp[None, :])


# Pure-JAX reference mirroring the PyTorch forward (for correctness check).
def reference_forward(x_nchw, we, be, wd, bd, wp, bp):
    N, C, T, V = x_nchw.shape
    K = wd.shape[0]
    pad = (K - 1) // 2
    x = jnp.transpose(x_nchw, (0, 2, 3, 1)).astype(jnp.float32)   # N,T,V,C
    res = x
    xe = jax.nn.relu(jnp.einsum('ntvc,cd->ntvd', x, we) + be)
    xe_pad = jnp.pad(xe, ((0, 0), (pad, pad), (0, 0), (0, 0)))
    acc = jnp.zeros_like(xe)
    for k in range(K):
        acc = acc + xe_pad[:, k:k + T] * wd[k]
    xd = jax.nn.relu(acc + bd)
    xp = jnp.einsum('ntvd,dc->ntvc', xd, wp) + bp
    out = xp + res
    return jnp.transpose(out, (0, 3, 1, 2))


if __name__ == "__main__":
    key = jax.random.PRNGKey(0)
    N, C, T, V = 2, 16, 16, 16
    expand_ratio, K = 2, 9

    kx, kp = jax.random.split(key)
    x = jax.random.normal(kx, (N, C, T, V), jnp.float32)
    folded = make_params(kp, C, expand_ratio, K)
    ref = reference_forward(x, *folded)

    # f32 matmul path — tight check against the f32 reference.
    out_f32 = temporal_sep_layer(x, make_kernel_params(folded, jnp.float32))
    out_f32 = jax.block_until_ready(out_f32)
    np.testing.assert_allclose(np.asarray(out_f32), np.asarray(ref),
                               rtol=1e-4, atol=1e-4)

    # bf16 matmul path (v6e/v7x MXU rate / VMEM win) — f32 accumulation, but
    # bf16-rounded matmul operands, so only a loose check vs the f32 reference.
    out_bf16 = temporal_sep_layer(x, make_kernel_params(folded, jnp.bfloat16))
    out_bf16 = jax.block_until_ready(out_bf16)
    np.testing.assert_allclose(np.asarray(out_bf16), np.asarray(ref),
                               rtol=1e-1, atol=1e-1)

    print("KERNEL_OK")
</pallas_src>

<mosaic_0001>
module attributes {stable_mosaic.version = 11 : i64} {
  func.func @_tsl_kernel(%arg0: i32, %arg1: memref<1x256x16xf32, #tpu.memory_space<vmem>>, %arg2: memref<16x32xf32, #tpu.memory_space<vmem>>, %arg3: memref<1x32xf32, #tpu.memory_space<vmem>>, %arg4: memref<9x32xf32, #tpu.memory_space<vmem>>, %arg5: memref<1x32xf32, #tpu.memory_space<vmem>>, %arg6: memref<32x16xf32, #tpu.memory_space<vmem>>, %arg7: memref<1x16xf32, #tpu.memory_space<vmem>>, %arg8: memref<1x256x16xf32, #tpu.memory_space<vmem>>, %arg9: memref<384x32xf32, #tpu.memory_space<vmem>>) attributes {dimension_semantics = [#tpu.dimension_semantics<parallel>], iteration_bounds = array<i64: 2>, scalar_prefetch = 0 : i64, scratch_operands = 1 : i64, tpu.core_type = #tpu.core_type<tc>, window_params = [{transform_indices = @transform_0, window_bounds = array<i64: 1, 256, 16>}, {pipeline_mode = #tpu.pipeline_mode<synchronous>, transform_indices = @transform_1, window_bounds = array<i64: 16, 32>}, {pipeline_mode = #tpu.pipeline_mode<synchronous>, transform_indices = @transform_2, window_bounds = array<i64: 1, 32>}, {pipeline_mode = #tpu.pipeline_mode<synchronous>, transform_indices = @transform_3, window_bounds = array<i64: 9, 32>}, {pipeline_mode = #tpu.pipeline_mode<synchronous>, transform_indices = @transform_4, window_bounds = array<i64: 1, 32>}, {pipeline_mode = #tpu.pipeline_mode<synchronous>, transform_indices = @transform_5, window_bounds = array<i64: 32, 16>}, {pipeline_mode = #tpu.pipeline_mode<synchronous>, transform_indices = @transform_6, window_bounds = array<i64: 1, 16>}, {transform_indices = @transform_7, window_bounds = array<i64: 1, 256, 16>}]} {
    %c0_i32 = arith.constant 0 : i32
    %0 = arith.cmpi eq, %arg0, %c0_i32 : i32
    %1 = arith.extui %0 : i1 to i32
    %c0_i32_0 = arith.constant 0 : i32
    %2 = arith.cmpi ne, %1, %c0_i32_0 : i32
    scf.if %2 {
      %cst_36 = arith.constant 0.000000e+00 : f32
      %92 = vector.broadcast %cst_36 : f32 to vector<64x32xf32>
      %c0_37 = arith.constant 0 : index
      %c0_38 = arith.constant 0 : index
      %93 = vector.load %arg9[%c0_37, %c0_38] : memref<384x32xf32, #tpu.memory_space<vmem>>, vector<64x32xf32>
      tpu.vector_store %arg9[%c0_37, %c0_38], %92 {strides = array<i32>} : memref<384x32xf32, #tpu.memory_space<vmem>>, vector<64x32xf32>,
      %cst_39 = arith.constant 0.000000e+00 : f32
      %94 = vector.broadcast %cst_39 : f32 to vector<64x32xf32>
      %c320 = arith.constant 320 : index
      %c0_40 = arith.constant 0 : index
      %95 = vector.load %arg9[%c320, %c0_40] : memref<384x32xf32, #tpu.memory_space<vmem>>, vector<64x32xf32>
      tpu.vector_store %arg9[%c320, %c0_40], %94 {strides = array<i32>} : memref<384x32xf32, #tpu.memory_space<vmem>>, vector<64x32xf32>,
    } else {
    }
    %c0 = arith.constant 0 : index
    %c0_1 = arith.constant 0 : index
    %c0_2 = arith.constant 0 : index
    %3 = vector.load %arg1[%c0, %c0_1, %c0_2] : memref<1x256x16xf32, #tpu.memory_space<vmem>>, vector<1x256x16xf32>
    %4 = vector.shape_cast %3 : vector<1x256x16xf32> to vector<256x16xf32>
    %c0_3 = arith.constant 0 : index
    %c0_4 = arith.constant 0 : index
    %5 = vector.load %arg2[%c0_3, %c0_4] : memref<16x32xf32, #tpu.memory_space<vmem>>, vector<16x32xf32>
    %cst = arith.constant dense<0.000000e+00> : vector<256x32xf32>
    %6 = tpu.matmul %4, %5, %cst {dimension_numbers = #tpu.dot_dimension_numbers<[1], [0], [0], [1], [0, 0, 1, 1], [], []>} : vector<256x16xf32>, vector<16x32xf32>, vector<256x32xf32> -> vector<256x32xf32>
    %c0_5 = arith.constant 0 : index
    %c0_6 = arith.constant 0 : index
    %7 = vector.load %arg3[%c0_5, %c0_6] : memref<1x32xf32, #tpu.memory_space<vmem>>, vector<1x32xf32>
    %8 = vector.broadcast %7 : vector<1x32xf32> to vector<256x32xf32>
    %9 = arith.addf %6, %8 : vector<256x32xf32>
    %cst_7 = arith.constant 0.000000e+00 : f32
    %10 = vector.broadcast %cst_7 : f32 to vector<256x32xf32>
    %11 = arith.maximumf %9, %10 : vector<256x32xf32>
    %c64 = arith.constant 64 : index
    %c0_8 = arith.constant 0 : index
    %12 = vector.load %arg9[%c64, %c0_8] : memref<384x32xf32, #tpu.memory_space<vmem>>, vector<256x32xf32>
    tpu.vector_store %arg9[%c64, %c0_8], %11 {strides = array<i32>} : memref<384x32xf32, #tpu.memory_space<vmem>>, vector<256x32xf32>,
    %c0_9 = arith.constant 0 : index
    %c0_10 = arith.constant 0 : index
    %13 = vector.load %arg4[%c0_9, %c0_10] : memref<9x32xf32, #tpu.memory_space<vmem>>, vector<9x32xf32>
    %c0_11 = arith.constant 0 : index
    %c0_12 = arith.constant 0 : index
    %14 = vector.load %arg5[%c0_11, %c0_12] : memref<1x32xf32, #tpu.memory_space<vmem>>, vector<1x32xf32>
    %c0_13 = arith.constant 0 : index
    %c0_14 = arith.constant 0 : index
    %15 = vector.load %arg9[%c0_13, %c0_14] : memref<384x32xf32, #tpu.memory_space<vmem>>, vector<256x32xf32>
    %16 = vector.extract_strided_slice %13 {offsets = [0, 0], sizes = [1, 32], strides = [1, 1]} : vector<9x32xf32> to vector<1x32xf32>
    %17 = vector.shape_cast %16 : vector<1x32xf32> to vector<32xf32>
    %18 = vector.shape_cast %17 : vector<32xf32> to vector<1x32xf32>
    %19 = vector.broadcast %18 : vector<1x32xf32> to vector<256x32xf32>
    %20 = arith.mulf %15, %19 : vector<256x32xf32>
    %c16 = arith.constant 16 : index
    %c0_15 = arith.constant 0 : index
    %21 = vector.load %arg9[%c16, %c0_15] : memref<384x32xf32, #tpu.memory_space<vmem>>, vector<256x32xf32>
    %22 = vector.extract_strided_slice %13 {offsets = [1, 0], sizes = [1, 32], strides = [1, 1]} : vector<9x32xf32> to vector<1x32xf32>
    %23 = vector.shape_cast %22 : vector<1x32xf32> to vector<32xf32>
    %24 = vector.shape_cast %23 : vector<32xf32> to vector<1x32xf32>
    %25 = vector.broadcast %24 : vector<1x32xf32> to vector<256x32xf32>
    %26 = arith.mulf %21, %25 : vector<256x32xf32>
    %27 = arith.addf %20, %26 : vector<256x32xf32>
    %c32 = arith.constant 32 : index
    %c0_16 = arith.constant 0 : index
    %28 = vector.load %arg9[%c32, %c0_16] : memref<384x32xf32, #tpu.memory_space<vmem>>, vector<256x32xf32>
    %29 = vector.extract_strided_slice %13 {offsets = [2, 0], sizes = [1, 32], strides = [1, 1]} : vector<9x32xf32> to vector<1x32xf32>
    %30 = vector.shape_cast %29 : vector<1x32xf32> to vector<32xf32>
    %31 = vector.shape_cast %30 : vector<32xf32> to vector<1x32xf32>
    %32 = vector.broadcast %31 : vector<1x32xf32> to vector<256x32xf32>
    %33 = arith.mulf %28, %32 : vector<256x32xf32>
    %34 = arith.addf %27, %33 : vector<256x32xf32>
    %c48 = arith.constant 48 : index
    %c0_17 = arith.constant 0 : index
    %35 = vector.load %arg9[%c48, %c0_17] : memref<384x32xf32, #tpu.memory_space<vmem>>, vector<256x32xf32>
    %36 = vector.extract_strided_slice %13 {offsets = [3, 0], sizes = [1, 32], strides = [1, 1]} : vector<9x32xf32> to vector<1x32xf32>
    %37 = vector.shape_cast %36 : vector<1x32xf32> to vector<32xf32>
    %38 = vector.shape_cast %37 : vector<32xf32> to vector<1x32xf32>
    %39 = vector.broadcast %38 : vector<1x32xf32> to vector<256x32xf32>
    %40 = arith.mulf %35, %39 : vector<256x32xf32>
    %41 = arith.addf %34, %40 : vector<256x32xf32>
    %c64_18 = arith.constant 64 : index
    %c0_19 = arith.constant 0 : index
    %42 = vector.load %arg9[%c64_18, %c0_19] : memref<384x32xf32, #tpu.memory_space<vmem>>, vector<256x32xf32>
    %43 = vector.extract_strided_slice %13 {offsets = [4, 0], sizes = [1, 32], strides = [1, 1]} : vector<9x32xf32> to vector<1x32xf32>
    %44 = vector.shape_cast %43 : vector<1x32xf32> to vector<32xf32>
    %45 = vector.shape_cast %44 : vector<32xf32> to vector<1x32xf32>
    %46 = vector.broadcast %45 : vector<1x32xf32> to vector<256x32xf32>
    %47 = arith.mulf %42, %46 : vector<256x32xf32>
    %48 = arith.addf %41, %47 : vector<256x32xf32>
    %c80 = arith.constant 80 : index
    %c0_20 = arith.constant 0 : index
    %49 = vector.load %arg9[%c80, %c0_20] : memref<384x32xf32, #tpu.memory_space<vmem>>, vector<256x32xf32>
    %50 = vector.extract_strided_slice %13 {offsets = [5, 0], sizes = [1, 32], strides = [1, 1]} : vector<9x32xf32> to vector<1x32xf32>
    %51 = vector.shape_cast %50 : vector<1x32xf32> to vector<32xf32>
    %52 = vector.shape_cast %51 : vector<32xf32> to vector<1x32xf32>
    %53 = vector.broadcast %52 : vector<1x32xf32> to vector<256x32xf32>
    %54 = arith.mulf %49, %53 : vector<256x32xf32>
    %55 = arith.addf %48, %54 : vector<256x32xf32>
    %c96 = arith.constant 96 : index
    %c0_21 = arith.constant 0 : index
    %56 = vector.load %arg9[%c96, %c0_21] : memref<384x32xf32, #tpu.memory_space<vmem>>, vector<256x32xf32>
    %57 = vector.extract_strided_slice %13 {offsets = [6, 0], sizes = [1, 32], strides = [1, 1]} : vector<9x32xf32> to vector<1x32xf32>
    %58 = vector.shape_cast %57 : vector<1x32xf32> to vector<32xf32>
    %59 = vector.shape_cast %58 : vector<32xf32> to vector<1x32xf32>
    %60 = vector.broadcast %59 : vector<1x32xf32> to vector<256x32xf32>
    %61 = arith.mulf %56, %60 : vector<256x32xf32>
    %62 = arith.addf %55, %61 : vector<256x32xf32>
    %c112 = arith.constant 112 : index
    %c0_22 = arith.constant 0 : index
    %63 = vector.load %arg9[%c112, %c0_22] : memref<384x32xf32, #tpu.memory_space<vmem>>, vector<256x32xf32>
    %64 = vector.extract_strided_slice %13 {offsets = [7, 0], sizes = [1, 32], strides = [1, 1]} : vector<9x32xf32> to vector<1x32xf32>
    %65 = vector.shape_cast %64 : vector<1x32xf32> to vector<32xf32>
    %66 = vector.shape_cast %65 : vector<32xf32> to vector<1x32xf32>
    %67 = vector.broadcast %66 : vector<1x32xf32> to vector<256x32xf32>
    %68 = arith.mulf %63, %67 : vector<256x32xf32>
    %69 = arith.addf %62, %68 : vector<256x32xf32>
    %c128 = arith.constant 128 : index
    %c0_23 = arith.constant 0 : index
    %70 = vector.load %arg9[%c128, %c0_23] : memref<384x32xf32, #tpu.memory_space<vmem>>, vector<256x32xf32>
    %71 = vector.extract_strided_slice %13 {offsets = [8, 0], sizes = [1, 32], strides = [1, 1]} : vector<9x32xf32> to vector<1x32xf32>
    %72 = vector.shape_cast %71 : vector<1x32xf32> to vector<32xf32>
    %73 = vector.shape_cast %72 : vector<32xf32> to vector<1x32xf32>
    %74 = vector.broadcast %73 : vector<1x32xf32> to vector<256x32xf32>
    %75 = arith.mulf %70, %74 : vector<256x32xf32>
    %76 = arith.addf %69, %75 : vector<256x32xf32>
    %77 = vector.broadcast %14 : vector<1x32xf32> to vector<256x32xf32>
    %78 = arith.addf %76, %77 : vector<256x32xf32>
    %cst_24 = arith.constant 0.000000e+00 : f32
    %79 = vector.broadcast %cst_24 : f32 to vector<256x32xf32>
    %80 = arith.maximumf %78, %79 : vector<256x32xf32>
    %c0_25 = arith.constant 0 : index
    %c0_26 = arith.constant 0 : index
    %81 = vector.load %arg6[%c0_25, %c0_26] : memref<32x16xf32, #tpu.memory_space<vmem>>, vector<32x16xf32>
    %cst_27 = arith.constant dense<0.000000e+00> : vector<256x16xf32>
    %82 = tpu.matmul %80, %81, %cst_27 {dimension_numbers = #tpu.dot_dimension_numbers<[1], [0], [0], [1], [0, 0, 1, 1], [], []>} : vector<256x32xf32>, vector<32x16xf32>, vector<256x16xf32> -> vector<256x16xf32>
    %c0_28 = arith.constant 0 : index
    %c0_29 = arith.constant 0 : index
    %83 = vector.load %arg7[%c0_28, %c0_29] : memref<1x16xf32, #tpu.memory_space<vmem>>, vector<1x16xf32>
    %84 = vector.broadcast %83 : vector<1x16xf32> to vector<256x16xf32>
    %85 = arith.addf %82, %84 : vector<256x16xf32>
    %c0_30 = arith.constant 0 : index
    %c0_31 = arith.constant 0 : index
    %c0_32 = arith.constant 0 : index
    %86 = vector.load %arg1[%c0_30, %c0_31, %c0_32] : memref<1x256x16xf32, #tpu.memory_space<vmem>>, vector<1x256x16xf32>
    %87 = vector.shape_cast %86 : vector<1x256x16xf32> to vector<256x16xf32>
    %88 = arith.addf %85, %87 : vector<256x16xf32>
    %c0_33 = arith.constant 0 : index
    %c0_34 = arith.constant 0 : index
    %c0_35 = arith.constant 0 : index
    %89 = vector.load %arg8[%c0_33, %c0_34, %c0_35] : memref<1x256x16xf32, #tpu.memory_space<vmem>>, vector<1x256x16xf32>
    %90 = vector.shape_cast %89 : vector<1x256x16xf32> to vector<256x16xf32>
    %91 = vector.shape_cast %88 : vector<256x16xf32> to vector<1x256x16xf32>
    tpu.vector_store %arg8[%c0_33, %c0_34, %c0_35], %91 {strides = array<i32>} : memref<1x256x16xf32, #tpu.memory_space<vmem>>, vector<1x256x16xf32>,
    return
  }
  func.func @transform_0(%arg0: i32) -> (i32, i32, i32) {
    %c0_i32 = arith.constant 0 : i32
    %c0_i32_0 = arith.constant 0 : i32
    %c0_i32_1 = arith.constant 0 : i32
    return %arg0, %c0_i32, %c0_i32_0 : i32, i32, i32
  }
  func.func @transform_1(%arg0: i32) -> (i32, i32) {
    %c0_i32 = arith.constant 0 : i32
    %c0_i32_0 = arith.constant 0 : i32
    %c0_i32_1 = arith.constant 0 : i32
    return %c0_i32, %c0_i32_0 : i32, i32
  }
  func.func @transform_2(%arg0: i32) -> (i32, i32) {
    %c0_i32 = arith.constant 0 : i32
    %c0_i32_0 = arith.constant 0 : i32
    %c0_i32_1 = arith.constant 0 : i32
    return %c0_i32, %c0_i32_0 : i32, i32
  }
  func.func @transform_3(%arg0: i32) -> (i32, i32) {
    %c0_i32 = arith.constant 0 : i32
    %c0_i32_0 = arith.constant 0 : i32
    %c0_i32_1 = arith.constant 0 : i32
    return %c0_i32, %c0_i32_0 : i32, i32
  }
  func.func @transform_4(%arg0: i32) -> (i32, i32) {
    %c0_i32 = arith.constant 0 : i32
    %c0_i32_0 = arith.constant 0 : i32
    %c0_i32_1 = arith.constant 0 : i32
    return %c0_i32, %c0_i32_0 : i32, i32
  }
  func.func @transform_5(%arg0: i32) -> (i32, i32) {
    %c0_i32 = arith.constant 0 : i32
    %c0_i32_0 = arith.constant 0 : i32
    %c0_i32_1 = arith.constant 0 : i32
    return %c0_i32, %c0_i32_0 : i32, i32
  }
  func.func @transform_6(%arg0: i32) -> (i32, i32) {
    %c0_i32 = arith.constant 0 : i32
    %c0_i32_0 = arith.constant 0 : i32
    %c0_i32_1 = arith.constant 0 : i32
    return %c0_i32, %c0_i32_0 : i32, i32
  }
  func.func @transform_7(%arg0: i32) -> (i32, i32, i32) {
    %c0_i32 = arith.constant 0 : i32
    %c0_i32_0 = arith.constant 0 : i32
    %c0_i32_1 = arith.constant 0 : i32
    return %arg0, %c0_i32, %c0_i32_0 : i32, i32, i32
  }
}

</mosaic_0001>

<llo_original>
// kernel: tpu_custom_call.1
$region0: #{tpu_custom_call.1}
  #allocation0 [shape = 'u32[]', space=smem, size = 0x4, offset = 0x4, fixed_abs, tag = 'smem constant byte address 0x4 - core index']
  #allocation1 [shape = 'u32[72,128]{1,0:T(1,128)}', space=vmem, size = 0x9000, scoped, tag = 'internal scratch']
  #allocation2 [shape = 'f32[384,32]{1,0:T(8,128)}', space=vmem, size = 0x30000, scoped, tag = 'scratch operand']
  %s0 = inlined_call_operand.vmem [shape: f32[2,256,16], index: 0, kind: input, shape index: {}]
  %s1 = inlined_call_operand.vmem [shape: f32[16,32], index: 1, kind: input, shape index: {}]
  %s2 = inlined_call_operand.vmem [shape: f32[1,32], index: 2, kind: input, shape index: {}]
  %s3 = inlined_call_operand.vmem [shape: f32[9,32], index: 3, kind: input, shape index: {}]
  %s4 = inlined_call_operand.vmem [shape: f32[1,32], index: 4, kind: input, shape index: {}]
  %s5 = inlined_call_operand.vmem [shape: f32[32,16], index: 5, kind: input, shape index: {}]
  %s6 = inlined_call_operand.vmem [shape: f32[1,16], index: 6, kind: input, shape index: {}]
  %s7 = inlined_call_operand.vmem [shape: f32[2,256,16], index: 7, kind: output, shape index: {}]
  %s8 = sld [smem:[#allocation0]]
  $region65: #{tpu_custom_call.1} parent=0
    _
  %s10 = ssub.s32 1, %s8
  %s11 = scalar_select 0, %s10, %s8
  loop: start=0, step=1, limit=4
  $region2: #{tpu_custom_call.1} parent=0 // loop_pre_header
    _
  $region3: #{tpu_custom_call.1} parent=0 // loop_header
    %s13 = sphi 0, %s17
    %p14 = scmp.ge.s32.totalorder %s13, 4
    %s23 = sphi 0, %s25
    %s26 = sphi 0, %s23
    %s27 = sphi 0, %s26
    %s43 = sphi 0, %s27
    %s47 = sphi 0, %s47
    %s49 = sphi 0, %s47
    %s50 = sphi 0, %s49
    %s64 = sphi 0, %s50
    %s68 = sphi 0, %s68
    %s70 = sphi 0, %s68
    %s71 = sphi 0, %s70
    %s85 = sphi 0, %s71
    %s89 = sphi 0, %s89
    %s91 = sphi 0, %s89
    %s92 = sphi 0, %s91
    %s106 = sphi 0, %s92
    %s110 = sphi 0, %s110
    %s112 = sphi 0, %s110
    %s113 = sphi 0, %s112
    %s127 = sphi 0, %s113
    %s131 = sphi 0, %s131
    %s133 = sphi 0, %s131
    %s134 = sphi 0, %s133
    %s148 = sphi 0, %s134
    %s152 = sphi 0, %s152
    %s154 = sphi 0, %s152
    %s155 = sphi 0, %s154
    %s169 = sphi 0, %s155
    %s175 = sphi 0, %s177
    %s178 = sphi 0, %s175
    %s179 = sphi 0, %s178
    %s195 = sphi 0, %s179
  $region4: #{tpu_custom_call.1} parent=0 // loop_header_branch
    %16 = sbr.rel (%p14) target = $region8
  $region5: #{tpu_custom_call.1} parent=0 // loop_body
    %s18 = ssub.s32 %s13, 1
    %s19 = ssub.s32 %s13, 2
    %s20 = sadd.s32 %s13, 1
    %s21 = ssub.s32 %s13, %s20
    %p22 = scmp.eq.s32.totalorder %s21, 0
    %s24 = sadd.s32 %s23, 1
    %s25 = scalar_select %p22, %s23, %s24
    %p28 = pneg %p22
    %p29 = scmp.eq.s32.totalorder %s13, 1
    %p30 = por %p28, %p29
    %p31 = scmp.ne.s32.totalorder %s23, %s26
    %p32 = scmp.eq.s32.totalorder %s13, 0
    %p33 = por %p31, %p32
    %p34 = scmp.ne.s32.totalorder %s23, %s26
    %p35 = scmp.eq.s32.totalorder %s18, 1
    %p36 = por %p34, %p35
    %p37 = scmp.ne.s32.totalorder %s26, %s27
    %p38 = scmp.eq.s32.totalorder %s18, 0
    %p39 = por %p37, %p38
    %p40 = scmp.ne.s32.totalorder %s26, %s27
    %p41 = scmp.eq.s32.totalorder %s19, 1
    %p42 = por %p40, %p41
    %p44 = scmp.ne.s32.totalorder %s27, %s43
    %p45 = scmp.eq.s32.totalorder %s19, 0
    %p46 = por %p44, %p45
    %s48 = sadd.s32 %s47, 1
    %p51 = scmp.eq.s32.totalorder %s13, 1
    %p52 = scmp.ne.s32.totalorder %s47, %s49
    %p53 = scmp.eq.s32.totalorder %s13, 0
    %p54 = por %p52, %p53
    %p55 = scmp.ne.s32.totalorder %s47, %s49
    %p56 = scmp.eq.s32.totalorder %s18, 1
    %p57 = por %p55, %p56
    %p58 = scmp.ne.s32.totalorder %s49, %s50
    %p59 = scmp.eq.s32.totalorder %s18, 0
    %p60 = por %p58, %p59
    %p61 = scmp.ne.s32.totalorder %s49, %s50
    %p62 = scmp.eq.s32.totalorder %s19, 1
    %p63 = por %p61, %p62
    %p65 = scmp.ne.s32.totalorder %s50, %s64
    %p66 = scmp.eq.s32.totalorder %s19, 0
    %p67 = por %p65, %p66
    %s69 = sadd.s32 %s68, 1
    %p72 = scmp.eq.s32.totalorder %s13, 1
    %p73 = scmp.ne.s32.totalorder %s68, %s70
    %p74 = scmp.eq.s32.totalorder %s13, 0
    %p75 = por %p73, %p74
    %p76 = scmp.ne.s32.totalorder %s68, %s70
    %p77 = scmp.eq.s32.totalorder %s18, 1
    %p78 = por %p76, %p77
    %p79 = scmp.ne.s32.totalorder %s70, %s71
    %p80 = scmp.eq.s32.totalorder %s18, 0
    %p81 = por %p79, %p80
    %p82 = scmp.ne.s32.totalorder %s70, %s71
    %p83 = scmp.eq.s32.totalorder %s19, 1
    %p84 = por %p82, %p83
    %p86 = scmp.ne.s32.totalorder %s71, %s85
    %p87 = scmp.eq.s32.totalorder %s19, 0
    %p88 = por %p86, %p87
    %s90 = sadd.s32 %s89, 1
    %p93 = scmp.eq.s32.totalorder %s13, 1
    %p94 = scmp.ne.s32.totalorder %s89, %s91
    %p95 = scmp.eq.s32.totalorder %s13, 0
    %p96 = por %p94, %p95
    %p97 = scmp.ne.s32.totalorder %s89, %s91
    %p98 = scmp.eq.s32.totalorder %s18, 1
    %p99 = por %p97, %p98
    %p100 = scmp.ne.s32.totalorder %s91, %s92
    %p101 = scmp.eq.s32.totalorder %s18, 0
    %p102 = por %p100, %p101
    %p103 = scmp.ne.s32.totalorder %s91, %s92
    %p104 = scmp.eq.s32.totalorder %s19, 1
    %p105 = por %p103, %p104
    %p107 = scmp.ne.s32.totalorder %s92, %s106
    %p108 = scmp.eq.s32.totalorder %s19, 0
    %p109 = por %p107, %p108
    %s111 = sadd.s32 %s110, 1
    %p114 = scmp.eq.s32.totalorder %s13, 1
    %p115 = scmp.ne.s32.totalorder %s110, %s112
    %p116 = scmp.eq.s32.totalorder %s13, 0
    %p117 = por %p115, %p116
    %p118 = scmp.ne.s32.totalorder %s110, %s112
    %p119 = scmp.eq.s32.totalorder %s18, 1
    %p120 = por %p118, %p119
    %p121 = scmp.ne.s32.totalorder %s112, %s113
    %p122 = scmp.eq.s32.totalorder %s18, 0
    %p123 = por %p121, %p122
    %p124 = scmp.ne.s32.totalorder %s112, %s113
    %p125 = scmp.eq.s32.totalorder %s19, 1
    %p126 = por %p124, %p125
    %p128 = scmp.ne.s32.totalorder %s113, %s127
    %p129 = scmp.eq.s32.totalorder %s19, 0
    %p130 = por %p128, %p129
    %s132 = sadd.s32 %s131, 1
    %p135 = scmp.eq.s32.totalorder %s13, 1
    %p136 = scmp.ne.s32.totalorder %s131, %s133
    %p137 = scmp.eq.s32.totalorder %s13, 0
    %p138 = por %p136, %p137
    %p139 = scmp.ne.s32.totalorder %s131, %s133
    %p140 = scmp.eq.s32.totalorder %s18, 1
    %p141 = por %p139, %p140
    %p142 = scmp.ne.s32.totalorder %s133, %s134
    %p143 = scmp.eq.s32.totalorder %s18, 0
    %p144 = por %p142, %p143
    %p145 = scmp.ne.s32.totalorder %s133, %s134
    %p146 = scmp.eq.s32.totalorder %s19, 1
    %p147 = por %p145, %p146
    %p149 = scmp.ne.s32.totalorder %s134, %s148
    %p150 = scmp.eq.s32.totalorder %s19, 0
    %p151 = por %p149, %p150
    %s153 = sadd.s32 %s152, 1
    %p156 = scmp.eq.s32.totalorder %s13, 1
    %p157 = scmp.ne.s32.totalorder %s152, %s154
    %p158 = scmp.eq.s32.totalorder %s13, 0
    %p159 = por %p157, %p158
    %p160 = scmp.ne.s32.totalorder %s152, %s154
    %p161 = scmp.eq.s32.totalorder %s18, 1
    %p162 = por %p160, %p161
    %p163 = scmp.ne.s32.totalorder %s154, %s155
    %p164 = scmp.eq.s32.totalorder %s18, 0
    %p165 = por %p163, %p164
    %p166 = scmp.ne.s32.totalorder %s154, %s155
    %p167 = scmp.eq.s32.totalorder %s19, 1
    %p168 = por %p166, %p167
    %p170 = scmp.ne.s32.totalorder %s155, %s169
    %p171 = scmp.eq.s32.totalorder %s19, 0
    %p172 = por %p170, %p171
    %s173 = ssub.s32 %s13, %s20
    %p174 = scmp.eq.s32.totalorder %s173, 0
    %s176 = sadd.s32 %s175, 1
    %s177 = scalar_select %p174, %s175, %s176
    %p180 = pneg %p174
    %p181 = scmp.eq.s32.totalorder %s13, 1
    %p182 = por %p180, %p181
    %p183 = scmp.ne.s32.totalorder %s175, %s178
    %p184 = scmp.eq.s32.totalorder %s13, 0
    %p185 = por %p183, %p184
    %p186 = scmp.ne.s32.totalorder %s175, %s178
    %p187 = scmp.eq.s32.totalorder %s18, 1
    %p188 = por %p186, %p187
    %p189 = scmp.ne.s32.totalorder %s178, %s179
    %p190 = scmp.eq.s32.totalorder %s18, 0
    %p191 = por %p189, %p190
    %p192 = scmp.ne.s32.totalorder %s178, %s179
    %p193 = scmp.eq.s32.totalorder %s19, 1
    %p194 = por %p192, %p193
    %p196 = scmp.ne.s32.totalorder %s179, %s195
    %p197 = scmp.eq.s32.totalorder %s19, 0
    %p198 = por %p196, %p197
    %p199 = scmp.le.s32.totalorder 1, %s13
    %p200 = scmp.lt.s32.totalorder %s13, 3
    %p201 = pnand %p199, %p200
    %p202 = pneg %p201
    // Predicated region
    $region9: #{tpu_custom_call.1} parent=5 // pred_check
      _
    $region10: #{tpu_custom_call.1} parent=5 // pred_check_branch
      %204 = sbr.rel (%p201) target = $region12
    $region11: #{tpu_custom_call.1} parent=5 // pred_region
      %s205 = ssub.s32 %s13, 1
      // Predicated region
      $region13: #{tpu_custom_call.1} parent=11 // pred_check
        %p206 = pneg %p60
      $region14: #{tpu_custom_call.1} parent=11 // pred_check_branch
        %208 = sbr.rel (%p206) target = $region16
      $region15: #{tpu_custom_call.1} parent=11 // pred_region
        _
      $region16: #{tpu_custom_call.1} parent=11 // pred_fallthru
        _
      // Predicated region
      $region17: #{tpu_custom_call.1} parent=11 // pred_check
        %p209 = pneg %p81
      $region18: #{tpu_custom_call.1} parent=11 // pred_check_branch
        %211 = sbr.rel (%p209) target = $region20
      $region19: #{tpu_custom_call.1} parent=11 // pred_region
        _
      $region20: #{tpu_custom_call.1} parent=11 // pred_fallthru
        _
      // Predicated region
      $region21: #{tpu_custom_call.1} parent=11 // pred_check
        %p212 = pneg %p102
      $region22: #{tpu_custom_call.1} parent=11 // pred_check_branch
        %214 = sbr.rel (%p212) target = $region24
      $region23: #{tpu_custom_call.1} parent=11 // pred_region
        _
      $region24: #{tpu_custom_call.1} parent=11 // pred_fallthru
        _
      // Predicated region
      $region25: #{tpu_custom_call.1} parent=11 // pred_check
        %p215 = pneg %p123
      $region26: #{tpu_custom_call.1} parent=11 // pred_check_branch
        %217 = sbr.rel (%p215) target = $region28
      $region27: #{tpu_custom_call.1} parent=11 // pred_region
        _
      $region28: #{tpu_custom_call.1} parent=11 // pred_fallthru
        _
      // Predicated region
      $region29: #{tpu_custom_call.1} parent=11 // pred_check
        %p218 = pneg %p144
      $region30: #{tpu_custom_call.1} parent=11 // pred_check_branch
        %220 = sbr.rel (%p218) target = $region32
      $region31: #{tpu_custom_call.1} parent=11 // pred_region
        _
      $region32: #{tpu_custom_call.1} parent=11 // pred_fallthru
        _
      // Predicated region
      $region33: #{tpu_custom_call.1} parent=11 // pred_check
        %p221 = pneg %p165
      $region34: #{tpu_custom_call.1} parent=11 // pred_check_branch
        %223 = sbr.rel (%p221) target = $region36
      $region35: #{tpu_custom_call.1} parent=11 // pred_region
        _
      $region36: #{tpu_custom_call.1} parent=11 // pred_fallthru
        _
    $region12: #{tpu_custom_call.1} parent=5 // pred_fallthru
      _
    %p224 = scmp.lt.s32.totalorder %s13, 2
    // Predicated region
    $region37: #{tpu_custom_call.1} parent=5 // pred_check
      %p225 = pneg %p224
    $region38: #{tpu_custom_call.1} parent=5 // pred_check_branch
      %227 = sbr.rel (%p225) target = $region40
    $region39: #{tpu_custom_call.1} parent=5 // pred_region
      // Predicated region
      $region41: #{tpu_custom_call.1} parent=39 // pred_check
        %p228 = pneg %p33
      $region42: #{tpu_custom_call.1} parent=39 // pred_check_branch
        %230 = sbr.rel (%p228) target = $region44
      $region43: #{tpu_custom_call.1} parent=39 // pred_region
        %p231 = scmp.lt.s32.totalorder %s13, 1
        %s232 = scalar_select %p231, %s13, 1
        %s233 = smul.addr %s232, 32
        %s234 = smul.addr %s233, 8
        %s235 = scalar_lea.vmem %s0, %s234
      $region44: #{tpu_custom_call.1} parent=39 // pred_fallthru
        _
    $region40: #{tpu_custom_call.1} parent=5 // pred_fallthru
      _
    %p236 = scmp.le.s32.totalorder 1, %s13
    %p237 = scmp.lt.s32.totalorder %s13, 3
    %p238 = pnand %p236, %p237
    %p239 = pneg %p238
    // Predicated region
    $region45: #{tpu_custom_call.1} parent=5 // pred_check
      _
    $region46: #{tpu_custom_call.1} parent=5 // pred_check_branch
      %241 = sbr.rel (%p238) target = $region48
    $region47: #{tpu_custom_call.1} parent=5 // pred_region
      %s242 = ssub.s32 %s13, 1
      %p243 = scmp.lt.s32.totalorder %s18, 1
      %s244 = scalar_select %p243, %s18, 1
      %s245 = smul.addr %s244, 32
      %s246 = smul.addr %s245, 8
      %s247 = scalar_lea.vmem %s0, %s246
      %p248 = pneg %p39
      %p249 = pneg %p36
      %p250 = pneg %p60
      %p251 = pneg %p57
      %p252 = pneg %p81
      %p253 = pneg %p78
      %p254 = pneg %p102
      %p255 = pneg %p99
      %p256 = pneg %p123
      %p257 = pneg %p120
      %p258 = pneg %p144
      %p259 = pneg %p141
      %p260 = pneg %p165
      %p261 = pneg %p162
      %p262 = pneg %p191
      %p263 = pneg %p188
      %p264 = scmp.lt.s32.totalorder %s18, 1
      %s265 = scalar_select %p264, %s18, 1
      %s266 = smul.addr %s265, 32
      %s267 = smul.addr %s266, 8
      %s268 = scalar_lea.vmem %s7, %s267
      %p269 = scmp.lt.s32.totalorder %s18, 1
      %s270 = scalar_select %p269, %s18, 1
      %s271 = smul.addr %s270, 32
      %s272 = smul.addr %s271, 8
      %s273 = scalar_lea.vmem %s0, %s272
      %p274 = scmp.lt.s32.totalorder %s18, 1
      %s275 = scalar_select %p274, %s18, 1
      %s276 = smul.addr %s275, 32
      %s277 = smul.addr %s276, 8
      %s278 = scalar_lea.vmem %s7, %s277
      %p279 = scmp.eq.s32.totalorder %s18, 0
      // Predicated region
      $region49: #{tpu_custom_call.1} parent=47 // pred_check
        %p280 = pneg %p279
      $region50: #{tpu_custom_call.1} parent=47 // pred_check_branch
        %282 = sbr.rel (%p280) target = $region52
      $region51: #{tpu_custom_call.1} parent=47 // pred_region
        %vm283 = vcmask 261120
        %284 = vst.msk [vmem:[#allocation2] sm:$0xff] %vm283, 0.0
        %285 = vst.msk [vmem:[#allocation2 + $0x8] sm:$0xff] %vm283, 0.0
        %286 = vst.msk [vmem:[#allocation2 + $0x10] sm:$0xff] %vm283, 0.0
        %287 = vst.msk [vmem:[#allocation2 + $0x18] sm:$0xff] %vm283, 0.0
        %288 = vst.msk [vmem:[#allocation2 + $0x20] sm:$0xff] %vm283, 0.0
        %289 = vst.msk [vmem:[#allocation2 + $0x28] sm:$0xff] %vm283, 0.0
        %290 = vst.msk [vmem:[#allocation2 + $0x30] sm:$0xff] %vm283, 0.0
        %291 = vst.msk [vmem:[#allocation2 + $0x38] sm:$0xff] %vm283, 0.0
        %292 = vst.msk [vmem:[#allocation2 + $0x140] sm:$0xff] %vm283, 0.0
        %293 = vst.msk [vmem:[#allocation2 + $0x148] sm:$0xff] %vm283, 0.0
        %294 = vst.msk [vmem:[#allocation2 + $0x150] sm:$0xff] %vm283, 0.0
        %295 = vst.msk [vmem:[#allocation2 + $0x158] sm:$0xff] %vm283, 0.0
        %296 = vst.msk [vmem:[#allocation2 + $0x160] sm:$0xff] %vm283, 0.0
        %297 = vst.msk [vmem:[#allocation2 + $0x168] sm:$0xff] %vm283, 0.0
        %298 = vst.msk [vmem:[#allocation2 + $0x170] sm:$0xff] %vm283, 0.0
        %299 = vst.msk [vmem:[#allocation2 + $0x178] sm:$0xff] %vm283, 0.0
      $region52: #{tpu_custom_call.1} parent=47 // pred_fallthru
        _
      %v300 = vld [vmem:[%s273] sm:$0xff]
      %v301 = vld [vmem:[%s273 + $0x8] sm:$0xff]
      %v302 = vld [vmem:[%s273 + $0x10] sm:$0xff]
      %v303 = vld [vmem:[%s273 + $0x18] sm:$0xff]
      %v304 = vld [vmem:[%s273 + $0x20] sm:$0xff]
      %v305 = vld [vmem:[%s273 + $0x28] sm:$0xff]
      %v306 = vld [vmem:[%s273 + $0x30] sm:$0xff]
      %v307 = vld [vmem:[%s273 + $0x38] sm:$0xff]
      %v308 = vld [vmem:[%s273 + $0x40] sm:$0xff]
      %v309 = vld [vmem:[%s273 + $0x48] sm:$0xff]
      %v310 = vld [vmem:[%s273 + $0x50] sm:$0xff]
      %v311 = vld [vmem:[%s273 + $0x58] sm:$0xff]
      %v312 = vld [vmem:[%s273 + $0x60] sm:$0xff]
      %v313 = vld [vmem:[%s273 + $0x68] sm:$0xff]
      %v314 = vld [vmem:[%s273 + $0x70] sm:$0xff]
      %v315 = vld [vmem:[%s273 + $0x78] sm:$0xff]
      %v316 = vld [vmem:[%s273 + $0x80] sm:$0xff]
      %v317 = vld [vmem:[%s273 + $0x88] sm:$0xff]
      %v318 = vld [vmem:[%s273 + $0x90] sm:$0xff]
      %v319 = vld [vmem:[%s273 + $0x98] sm:$0xff]
      %v320 = vld [vmem:[%s273 + $0xa0] sm:$0xff]
      %v321 = vld [vmem:[%s273 + $0xa8] sm:$0xff]
      %v322 = vld [vmem:[%s273 + $0xb0] sm:$0xff]
      %v323 = vld [vmem:[%s273 + $0xb8] sm:$0xff]
      %v324 = vld [vmem:[%s273 + $0xc0] sm:$0xff]
      %v325 = vld [vmem:[%s273 + $0xc8] sm:$0xff]
      %v326 = vld [vmem:[%s273 + $0xd0] sm:$0xff]
      %v327 = vld [vmem:[%s273 + $0xd8] sm:$0xff]
      %v328 = vld [vmem:[%s273 + $0xe0] sm:$0xff]
      %v329 = vld [vmem:[%s273 + $0xe8] sm:$0xff]
      %v330 = vld [vmem:[%s273 + $0xf0] sm:$0xff]
      %v331 = vld [vmem:[%s273 + $0xf8] sm:$0xff]
      %v332 = vld [vmem:[%s1] sm:$0xff]
      %v333 = vld [vmem:[%s1 + $0x8] sm:$0xff]
      %v334 = vld [vmem:[%s2] sm:$0x1]
      %v336 = vperm.slane %v334, 0
      %vm338 = vcmask 130048
      %v340 = vsel %vm338, %v300, 0
      %v343 = vsel %vm338, %v301, 0
      %v346 = vsel %vm338, %v302, 0
      %v349 = vsel %vm338, %v303, 0
      %v352 = vsel %vm338, %v304, 0
      %v355 = vsel %vm338, %v305, 0
      %v358 = vsel %vm338, %v306, 0
      %v361 = vsel %vm338, %v307, 0
      %v364 = vsel %vm338, %v308, 0
      %v367 = vsel %vm338, %v309, 0
      %v370 = vsel %vm338, %v310, 0
      %v373 = vsel %vm338, %v311, 0
      %v376 = vsel %vm338, %v312, 0
      %v379 = vsel %vm338, %v313, 0
      %v382 = vsel %vm338, %v314, 0
      %v385 = vsel %vm338, %v315, 0
      %v388 = vsel %vm338, %v316, 0
      %v391 = vsel %vm338, %v317, 0
      %v394 = vsel %vm338, %v318, 0
      %v397 = vsel %vm338, %v319, 0
      %v400 = vsel %vm338, %v320, 0
      %v403 = vsel %vm338, %v321, 0
      %v406 = vsel %vm338, %v322, 0
      %v409 = vsel %vm338, %v323, 0
      %v412 = vsel %vm338, %v324, 0
      %v415 = vsel %vm338, %v325, 0
      %v418 = vsel %vm338, %v326, 0
      %v421 = vsel %vm338, %v327, 0
      %v424 = vsel %vm338, %v328, 0
      %v427 = vsel %vm338, %v329, 0
      %v430 = vsel %vm338, %v330, 0
      %v433 = vsel %vm338, %v331, 0
      %435 = vmatpush.msra.mxu0 0.0
      %436 = vmatpush.msra.mxu0 0.0
      %437 = vmatpush.msra.mxu0 0.0
      %438 = vmatpush.msra.mxu0 0.0
      %439 = vmatpush.msra.mxu0 0.0
      %440 = vmatpush.msra.mxu0 0.0
      %441 = vmatpush.msra.mxu0 0.0
      %442 = vmatpush.msra.mxu0 0.0
      %443 = vmatpush.msra.mxu0 0.0
      %444 = vmatpush.msra.mxu0 0.0
      %445 = vmatpush.msra.mxu0 0.0
      %446 = vmatpush.msra.mxu0 0.0
      %447 = vmatpush.msra.mxu0 0.0
      %448 = vmatpush.msra.mxu0 0.0
      %449 = vmatpush.msra.mxu0 %v333
      %450 = vmatpush.msra.mxu0 %v332
      %451 = vmatmul.f32.gmra.mxu0 %v340
      %v452 = vpop.f32.mrf.mxu0
      %v453 = vadd.f32 %v336, %v452
      %454 = vmatmul.f32.gmra.mxu0 %v343
      %v455 = vpop.f32.mrf.mxu0
      %v456 = vadd.f32 %v336, %v455
      %457 = vmatmul.f32.gmra.mxu0 %v346
      %v458 = vpop.f32.mrf.mxu0
      %v459 = vadd.f32 %v336, %v458
      %460 = vmatmul.f32.gmra.mxu0 %v349
      %v461 = vpop.f32.mrf.mxu0
      %v462 = vadd.f32 %v336, %v461
      %463 = vmatmul.f32.gmra.mxu0 %v352
      %v464 = vpop.f32.mrf.mxu0
      %v465 = vadd.f32 %v336, %v464
      %466 = vmatmul.f32.gmra.mxu0 %v355
      %v467 = vpop.f32.mrf.mxu0
      %v468 = vadd.f32 %v336, %v467
      %469 = vmatmul.f32.gmra.mxu0 %v358
      %v470 = vpop.f32.mrf.mxu0
      %v471 = vadd.f32 %v336, %v470
      %472 = vmatmul.f32.gmra.mxu0 %v361
      %v473 = vpop.f32.mrf.mxu0
      %v474 = vadd.f32 %v336, %v473
      %475 = vmatmul.f32.gmra.mxu0 %v364
      %v476 = vpop.f32.mrf.mxu0
      %v477 = vadd.f32 %v336, %v476
      %478 = vmatmul.f32.gmra.mxu0 %v367
      %v479 = vpop.f32.mrf.mxu0
      %v480 = vadd.f32 %v336, %v479
      %481 = vmatmul.f32.gmra.mxu0 %v370
      %v482 = vpop.f32.mrf.mxu0
      %v483 = vadd.f32 %v336, %v482
      %484 = vmatmul.f32.gmra.mxu0 %v373
      %v485 = vpop.f32.mrf.mxu0
      %v486 = vadd.f32 %v336, %v485
      %487 = vmatmul.f32.gmra.mxu0 %v376
      %v488 = vpop.f32.mrf.mxu0
      %v489 = vadd.f32 %v336, %v488
      %490 = vmatmul.f32.gmra.mxu0 %v379
      %v491 = vpop.f32.mrf.mxu0
      %v492 = vadd.f32 %v336, %v491
      %493 = vmatmul.f32.gmra.mxu0 %v382
      %v494 = vpop.f32.mrf.mxu0
      %v495 = vadd.f32 %v336, %v494
      %496 = vmatmul.f32.gmra.mxu0 %v385
      %v497 = vpop.f32.mrf.mxu0
      %v498 = vadd.f32 %v336, %v497
      %499 = vmatmul.f32.gmra.mxu0 %v388
      %v500 = vpop.f32.mrf.mxu0
      %v501 = vadd.f32 %v336, %v500
      %502 = vmatmul.f32.gmra.mxu0 %v391
      %v503 = vpop.f32.mrf.mxu0
      %v504 = vadd.f32 %v336, %v503
      %505 = vmatmul.f32.gmra.mxu0 %v394
      %v506 = vpop.f32.mrf.mxu0
      %v507 = vadd.f32 %v336, %v506
      %508 = vmatmul.f32.gmra.mxu0 %v397
      %v509 = vpop.f32.mrf.mxu0
      %v510 = vadd.f32 %v336, %v509
      %511 = vmatmul.f32.gmra.mxu0 %v400
      %v512 = vpop.f32.mrf.mxu0
      %v513 = vadd.f32 %v336, %v512
      %514 = vmatmul.f32.gmra.mxu0 %v403
      %v515 = vpop.f32.mrf.mxu0
      %v516 = vadd.f32 %v336, %v515
      %517 = vmatmul.f32.gmra.mxu0 %v406
      %v518 = vpop.f32.mrf.mxu0
      %v519 = vadd.f32 %v336, %v518
      %520 = vmatmul.f32.gmra.mxu0 %v409
      %v521 = vpop.f32.mrf.mxu0
      %v522 = vadd.f32 %v336, %v521
      %523 = vmatmul.f32.gmra.mxu0 %v412
      %v524 = vpop.f32.mrf.mxu0
      %v525 = vadd.f32 %v336, %v524
      %526 = vmatmul.f32.gmra.mxu0 %v415
      %v527 = vpop.f32.mrf.mxu0
      %v528 = vadd.f32 %v336, %v527
      %529 = vmatmul.f32.gmra.mxu0 %v418
      %v530 = vpop.f32.mrf.mxu0
      %v531 = vadd.f32 %v336, %v530
      %532 = vmatmul.f32.gmra.mxu0 %v421
      %v533 = vpop.f32.mrf.mxu0
      %v534 = vadd.f32 %v336, %v533
      %535 = vmatmul.f32.gmra.mxu0 %v424
      %v536 = vpop.f32.mrf.mxu0
      %v537 = vadd.f32 %v336, %v536
      %538 = vmatmul.f32.gmra.mxu0 %v427
      %v539 = vpop.f32.mrf.mxu0
      %v540 = vadd.f32 %v336, %v539
      %541 = vmatmul.f32.gmra.mxu0 %v430
      %v542 = vpop.f32.mrf.mxu0
      %v543 = vadd.f32 %v336, %v542
      %544 = vmatmul.f32.gmra.mxu0 %v433
      %v545 = vpop.f32.mrf.mxu0
      %v546 = vadd.f32 %v336, %v545
      %547 = vdwg.mxu0
      %v548 = vmax.f32 %v453, 0.0
      %v549 = vmax.f32 %v456, 0.0
      %v550 = vmax.f32 %v459, 0.0
      %v551 = vmax.f32 %v462, 0.0
      %v552 = vmax.f32 %v465, 0.0
      %v553 = vmax.f32 %v468, 0.0
      %v554 = vmax.f32 %v471, 0.0
      %v555 = vmax.f32 %v474, 0.0
      %v556 = vmax.f32 %v477, 0.0
      %v557 = vmax.f32 %v480, 0.0
      %v558 = vmax.f32 %v483, 0.0
      %v559 = vmax.f32 %v486, 0.0
      %v560 = vmax.f32 %v489, 0.0
      %v561 = vmax.f32 %v492, 0.0
      %v562 = vmax.f32 %v495, 0.0
      %v563 = vmax.f32 %v498, 0.0
      %v564 = vmax.f32 %v501, 0.0
      %v565 = vmax.f32 %v504, 0.0
      %v566 = vmax.f32 %v507, 0.0
      %v567 = vmax.f32 %v510, 0.0
      %v568 = vmax.f32 %v513, 0.0
      %v569 = vmax.f32 %v516, 0.0
      %v570 = vmax.f32 %v519, 0.0
      %v571 = vmax.f32 %v522, 0.0
      %v572 = vmax.f32 %v525, 0.0
      %v573 = vmax.f32 %v528, 0.0
      %v574 = vmax.f32 %v531, 0.0
      %v575 = vmax.f32 %v534, 0.0
      %v576 = vmax.f32 %v537, 0.0
      %v577 = vmax.f32 %v540, 0.0
      %v578 = vmax.f32 %v543, 0.0
      %v579 = vmax.f32 %v546, 0.0
      %vm580 = vcmask 261120
      %581 = vst.msk [vmem:[#allocation2 + $0x40] sm:$0xff] %vm580, %v548
      %582 = vst.msk [vmem:[#allocation2 + $0x48] sm:$0xff] %vm580, %v549
      %583 = vst.msk [vmem:[#allocation2 + $0x50] sm:$0xff] %vm580, %v550
      %584 = vst.msk [vmem:[#allocation2 + $0x58] sm:$0xff] %vm580, %v551
      %585 = vst.msk [vmem:[#allocation2 + $0x60] sm:$0xff] %vm580, %v552
      %586 = vst.msk [vmem:[#allocation2 + $0x68] sm:$0xff] %vm580, %v553
      %587 = vst.msk [vmem:[#allocation2 + $0x70] sm:$0xff] %vm580, %v554
      %588 = vst.msk [vmem:[#allocation2 + $0x78] sm:$0xff] %vm580, %v555
      %589 = vst.msk [vmem:[#allocation2 + $0x80] sm:$0xff] %vm580, %v556
      %590 = vst.msk [vmem:[#allocation2 + $0x88] sm:$0xff] %vm580, %v557
      %591 = vst.msk [vmem:[#allocation2 + $0x90] sm:$0xff] %vm580, %v558
      %592 = vst.msk [vmem:[#allocation2 + $0x98] sm:$0xff] %vm580, %v559
      %593 = vst.msk [vmem:[#allocation2 + $0xa0] sm:$0xff] %vm580, %v560
      %594 = vst.msk [vmem:[#allocation2 + $0xa8] sm:$0xff] %vm580, %v561
      %595 = vst.msk [vmem:[#allocation2 + $0xb0] sm:$0xff] %vm580, %v562
      %596 = vst.msk [vmem:[#allocation2 + $0xb8] sm:$0xff] %vm580, %v563
      %597 = vst.msk [vmem:[#allocation2 + $0xc0] sm:$0xff] %vm580, %v564
      %598 = vst.msk [vmem:[#allocation2 + $0xc8] sm:$0xff] %vm580, %v565
      %599 = vst.msk [vmem:[#allocation2 + $0xd0] sm:$0xff] %vm580, %v566
      %600 = vst.msk [vmem:[#allocation2 + $0xd8] sm:$0xff] %vm580, %v567
      %601 = vst.msk [vmem:[#allocation2 + $0xe0] sm:$0xff] %vm580, %v568
      %602 = vst.msk [vmem:[#allocation2 + $0xe8] sm:$0xff] %vm580, %v569
      %603 = vst.msk [vmem:[#allocation2 + $0xf0] sm:$0xff] %vm580, %v570
      %604 = vst.msk [vmem:[#allocation2 + $0xf8] sm:$0xff] %vm580, %v571
      %605 = vst.msk [vmem:[#allocation2 + $0x100] sm:$0xff] %vm580, %v572
      %606 = vst.msk [vmem:[#allocation2 + $0x108] sm:$0xff] %vm580, %v573
      %607 = vst.msk [vmem:[#allocation2 + $0x110] sm:$0xff] %vm580, %v574
      %608 = vst.msk [vmem:[#allocation2 + $0x118] sm:$0xff] %vm580, %v575
      %609 = vst.msk [vmem:[#allocation2 + $0x120] sm:$0xff] %vm580, %v576
      %610 = vst.msk [vmem:[#allocation2 + $0x128] sm:$0xff] %vm580, %v577
      %611 = vst.msk [vmem:[#allocation2 + $0x130] sm:$0xff] %vm580, %v578
      %612 = vst.msk [vmem:[#allocation2 + $0x138] sm:$0xff] %vm580, %v579
      %v613 = vld [vmem:[%s3] sm:$0xff]
      %v614 = vld [vmem:[%s3 + $0x8] sm:$0x1]
      %v615 = vld [vmem:[%s4] sm:$0x1]
      %v616 = vld [vmem:[#allocation2] sm:$0xff]
      %v617 = vld [vmem:[#allocation2 + $0x8] sm:$0xff]
      %v618 = vld [vmem:[#allocation2 + $0x10] sm:$0xff]
      %v619 = vld [vmem:[#allocation2 + $0x18] sm:$0xff]
      %v620 = vld [vmem:[#allocation2 + $0x20] sm:$0xff]
      %v621 = vld [vmem:[#allocation2 + $0x28] sm:$0xff]
      %v622 = vld [vmem:[#allocation2 + $0x30] sm:$0xff]
      %v623 = vld [vmem:[#allocation2 + $0x38] sm:$0xff]
      %v624 = vld [vmem:[#allocation2 + $0x40] sm:$0xff]
      %v625 = vld [vmem:[#allocation2 + $0x48] sm:$0xff]
      %v626 = vld [vmem:[#allocation2 + $0x50] sm:$0xff]
      %v627 = vld [vmem:[#allocation2 + $0x58] sm:$0xff]
      %v628 = vld [vmem:[#allocation2 + $0x60] sm:$0xff]
      %v629 = vld [vmem:[#allocation2 + $0x68] sm:$0xff]
      %v630 = vld [vmem:[#allocation2 + $0x70] sm:$0xff]
      %v631 = vld [vmem:[#allocation2 + $0x78] sm:$0xff]
      %v632 = vld [vmem:[#allocation2 + $0x80] sm:$0xff]
      %v633 = vld [vmem:[#allocation2 + $0x88] sm:$0xff]
      %v634 = vld [vmem:[#allocation2 + $0x90] sm:$0xff]
      %v635 = vld [vmem:[#allocation2 + $0x98] sm:$0xff]
      %v636 = vld [vmem:[#allocation2 + $0xa0] sm:$0xff]
      %v637 = vld [vmem:[#allocation2 + $0xa8] sm:$0xff]
      %v638 = vld [vmem:[#allocation2 + $0xb0] sm:$0xff]
      %v639 = vld [vmem:[#allocation2 + $0xb8] sm:$0xff]
      %v640 = vld [vmem:[#allocation2 + $0xc0] sm:$0xff]
      %v641 = vld [vmem:[#allocation2 + $0xc8] sm:$0xff]
      %v642 = vld [vmem:[#allocation2 + $0xd0] sm:$0xff]
      %v643 = vld [vmem:[#allocation2 + $0xd8] sm:$0xff]
      %v644 = vld [vmem:[#allocation2 + $0xe0] sm:$0xff]
      %v645 = vld [vmem:[#allocation2 + $0xe8] sm:$0xff]
      %v646 = vld [vmem:[#allocation2 + $0xf0] sm:$0xff]
      %v647 = vld [vmem:[#allocation2 + $0xf8] sm:$0xff]
      %v648 = vperm.slane %v613, 0
      %v649 = vmul.f32 %v616, %v648
      %v650 = vmul.f32 %v617, %v648
      %v651 = vmul.f32 %v618, %v648
      %v652 = vmul.f32 %v619, %v648
      %v653 = vmul.f32 %v620, %v648
      %v654 = vmul.f32 %v621, %v648
      %v655 = vmul.f32 %v622, %v648
      %v656 = vmul.f32 %v623, %v648
      %v657 = vmul.f32 %v624, %v648
      %v658 = vmul.f32 %v625, %v648
      %v659 = vmul.f32 %v626, %v648
      %v660 = vmul.f32 %v627, %v648
      %v661 = vmul.f32 %v628, %v648
      %v662 = vmul.f32 %v629, %v648
      %v663 = vmul.f32 %v630, %v648
      %v664 = vmul.f32 %v631, %v648
      %v665 = vmul.f32 %v632, %v648
      %v666 = vmul.f32 %v633, %v648
      %v667 = vmul.f32 %v634, %v648
      %v668 = vmul.f32 %v635, %v648
      %v669 = vmul.f32 %v636, %v648
      %v670 = vmul.f32 %v637, %v648
      %v671 = vmul.f32 %v638, %v648
      %v672 = vmul.f32 %v639, %v648
      %v673 = vmul.f32 %v640, %v648
      %v674 = vmul.f32 %v641, %v648
      %v675 = vmul.f32 %v642, %v648
      %v676 = vmul.f32 %v643, %v648
      %v677 = vmul.f32 %v644, %v648
      %v678 = vmul.f32 %v645, %v648
      %v679 = vmul.f32 %v646, %v648
      %v680 = vmul.f32 %v647, %v648
      %v681 = vld [vmem:[#allocation2 + $0x100] sm:$0xff]
      %v682 = vld [vmem:[#allocation2 + $0x108] sm:$0xff]
      %v683 = vperm.slane %v613, 1
      %v684 = vmul.f32 %v618, %v683
      %v685 = vmul.f32 %v619, %v683
      %v686 = vmul.f32 %v620, %v683
      %v687 = vmul.f32 %v621, %v683
      %v688 = vmul.f32 %v622, %v683
      %v689 = vmul.f32 %v623, %v683
      %v690 = vmul.f32 %v624, %v683
      %v691 = vmul.f32 %v625, %v683
      %v692 = vmul.f32 %v626, %v683
      %v693 = vmul.f32 %v627, %v683
      %v694 = vmul.f32 %v628, %v683
      %v695 = vmul.f32 %v629, %v683
      %v696 = vmul.f32 %v630, %v683
      %v697 = vmul.f32 %v631, %v683
      %v698 = vmul.f32 %v632, %v683
      %v699 = vmul.f32 %v633, %v683
      %v700 = vmul.f32 %v634, %v683
      %v701 = vmul.f32 %v635, %v683
      %v702 = vmul.f32 %v636, %v683
      %v703 = vmul.f32 %v637, %v683
      %v704 = vmul.f32 %v638, %v683
      %v705 = vmul.f32 %v639, %v683
      %v706 = vmul.f32 %v640, %v683
      %v707 = vmul.f32 %v641, %v683
      %v708 = vmul.f32 %v642, %v683
      %v709 = vmul.f32 %v643, %v683
      %v710 = vmul.f32 %v644, %v683
      %v711 = vmul.f32 %v645, %v683
      %v712 = vmul.f32 %v646, %v683
      %v713 = vmul.f32 %v647, %v683
      %v714 = vmul.f32 %v681, %v683
      %v715 = vmul.f32 %v682, %v683
      %v716 = vadd.f32 %v649, %v684
      %v717 = vadd.f32 %v650, %v685
      %v718 = vadd.f32 %v651, %v686
      %v719 = vadd.f32 %v652, %v687
      %v720 = vadd.f32 %v653, %v688
      %v721 = vadd.f32 %v654, %v689
      %v722 = vadd.f32 %v655, %v690
      %v723 = vadd.f32 %v656, %v691
      %v724 = vadd.f32 %v657, %v692
      %v725 = vadd.f32 %v658, %v693
      %v726 = vadd.f32 %v659, %v694
      %v727 = vadd.f32 %v660, %v695
      %v728 = vadd.f32 %v661, %v696
      %v729 = vadd.f32 %v662, %v697
      %v730 = vadd.f32 %v663, %v698
      %v731 = vadd.f32 %v664, %v699
      %v732 = vadd.f32 %v665, %v700
      %v733 = vadd.f32 %v666, %v701
      %v734 = vadd.f32 %v667, %v702
      %v735 = vadd.f32 %v668, %v703
      %v736 = vadd.f32 %v669, %v704
      %v737 = vadd.f32 %v670, %v705
      %v738 = vadd.f32 %v671, %v706
      %v739 = vadd.f32 %v672, %v707
      %v740 = vadd.f32 %v673, %v708
      %v741 = vadd.f32 %v674, %v709
      %v742 = vadd.f32 %v675, %v710
      %v743 = vadd.f32 %v676, %v711
      %v744 = vadd.f32 %v677, %v712
      %v745 = vadd.f32 %v678, %v713
      %v746 = vadd.f32 %v679, %v714
      %v747 = vadd.f32 %v680, %v715
      %v748 = vld [vmem:[#allocation2 + $0x110] sm:$0xff]
      %v749 = vld [vmem:[#allocation2 + $0x118] sm:$0xff]
      %v750 = vperm.slane %v613, 2
      %v751 = vmul.f32 %v620, %v750
      %v752 = vmul.f32 %v621, %v750
      %v753 = vmul.f32 %v622, %v750
      %v754 = vmul.f32 %v623, %v750
      %v755 = vmul.f32 %v624, %v750
      %v756 = vmul.f32 %v625, %v750
      %v757 = vmul.f32 %v626, %v750
      %v758 = vmul.f32 %v627, %v750
      %v759 = vmul.f32 %v628, %v750
      %v760 = vmul.f32 %v629, %v750
      %v761 = vmul.f32 %v630, %v750
      %v762 = vmul.f32 %v631, %v750
      %v763 = vmul.f32 %v632, %v750
      %v764 = vmul.f32 %v633, %v750
      %v765 = vmul.f32 %v634, %v750
      %v766 = vmul.f32 %v635, %v750
      %v767 = vmul.f32 %v636, %v750
      %v768 = vmul.f32 %v637, %v750
      %v769 = vmul.f32 %v638, %v750
      %v770 = vmul.f32 %v639, %v750
      %v771 = vmul.f32 %v640, %v750
      %v772 = vmul.f32 %v641, %v750
      %v773 = vmul.f32 %v642, %v750
      %v774 = vmul.f32 %v643, %v750
      %v775 = vmul.f32 %v644, %v750
      %v776 = vmul.f32 %v645, %v750
      %v777 = vmul.f32 %v646, %v750
      %v778 = vmul.f32 %v647, %v750
      %v779 = vmul.f32 %v681, %v750
      %v780 = vmul.f32 %v682, %v750
      %v781 = vmul.f32 %v748, %v750
      %v782 = vmul.f32 %v749, %v750
      %v783 = vadd.f32 %v716, %v751
      %v784 = vadd.f32 %v717, %v752
      %v785 = vadd.f32 %v718, %v753
      %v786 = vadd.f32 %v719, %v754
      %v787 = vadd.f32 %v720, %v755
      %v788 = vadd.f32 %v721, %v756
      %v789 = vadd.f32 %v722, %v757
      %v790 = vadd.f32 %v723, %v758
      %v791 = vadd.f32 %v724, %v759
      %v792 = vadd.f32 %v725, %v760
      %v793 = vadd.f32 %v726, %v761
      %v794 = vadd.f32 %v727, %v762
      %v795 = vadd.f32 %v728, %v763
      %v796 = vadd.f32 %v729, %v764
      %v797 = vadd.f32 %v730, %v765
      %v798 = vadd.f32 %v731, %v766
      %v799 = vadd.f32 %v732, %v767
      %v800 = vadd.f32 %v733, %v768
      %v801 = vadd.f32 %v734, %v769
      %v802 = vadd.f32 %v735, %v770
      %v803 = vadd.f32 %v736, %v771
      %v804 = vadd.f32 %v737, %v772
      %v805 = vadd.f32 %v738, %v773
      %v806 = vadd.f32 %v739, %v774
      %v807 = vadd.f32 %v740, %v775
      %v808 = vadd.f32 %v741, %v776
      %v809 = vadd.f32 %v742, %v777
      %v810 = vadd.f32 %v743, %v778
      %v811 = vadd.f32 %v744, %v779
      %v812 = vadd.f32 %v745, %v780
      %v813 = vadd.f32 %v746, %v781
      %v814 = vadd.f32 %v747, %v782
      %v815 = vld [vmem:[#allocation2 + $0x120] sm:$0xff]
      %v816 = vld [vmem:[#allocation2 + $0x128] sm:$0xff]
      %v817 = vperm.slane %v613, 3
      %v818 = vmul.f32 %v622, %v817
      %v819 = vmul.f32 %v623, %v817
      %v820 = vmul.f32 %v624, %v817
      %v821 = vmul.f32 %v625, %v817
      %v822 = vmul.f32 %v626, %v817
      %v823 = vmul.f32 %v627, %v817
      %v824 = vmul.f32 %v628, %v817
      %v825 = vmul.f32 %v629, %v817
      %v826 = vmul.f32 %v630, %v817
      %v827 = vmul.f32 %v631, %v817
      %v828 = vmul.f32 %v632, %v817
      %v829 = vmul.f32 %v633, %v817
      %v830 = vmul.f32 %v634, %v817
      %v831 = vmul.f32 %v635, %v817
      %v832 = vmul.f32 %v636, %v817
      %v833 = vmul.f32 %v637, %v817
      %v834 = vmul.f32 %v638, %v817
      %v835 = vmul.f32 %v639, %v817
      %v836 = vmul.f32 %v640, %v817
      %v837 = vmul.f32 %v641, %v817
      %v838 = vmul.f32 %v642, %v817
      %v839 = vmul.f32 %v643, %v817
      %v840 = vmul.f32 %v644, %v817
      %v841 = vmul.f32 %v645, %v817
      %v842 = vmul.f32 %v646, %v817
      %v843 = vmul.f32 %v647, %v817
      %v844 = vmul.f32 %v681, %v817
      %v845 = vmul.f32 %v682, %v817
      %v846 = vmul.f32 %v748, %v817
      %v847 = vmul.f32 %v749, %v817
      %v848 = vmul.f32 %v815, %v817
      %v849 = vmul.f32 %v816, %v817
      %v850 = vadd.f32 %v783, %v818
      %v851 = vadd.f32 %v784, %v819
      %v852 = vadd.f32 %v785, %v820
      %v853 = vadd.f32 %v786, %v821
      %v854 = vadd.f32 %v787, %v822
      %v855 = vadd.f32 %v788, %v823
      %v856 = vadd.f32 %v789, %v824
      %v857 = vadd.f32 %v790, %v825
      %v858 = vadd.f32 %v791, %v826
      %v859 = vadd.f32 %v792, %v827
      %v860 = vadd.f32 %v793, %v828
      %v861 = vadd.f32 %v794, %v829
      %v862 = vadd.f32 %v795, %v830
      %v863 = vadd.f32 %v796, %v831
      %v864 = vadd.f32 %v797, %v832
      %v865 = vadd.f32 %v798, %v833
      %v866 = vadd.f32 %v799, %v834
      %v867 = vadd.f32 %v800, %v835
      %v868 = vadd.f32 %v801, %v836
      %v869 = vadd.f32 %v802, %v837
      %v870 = vadd.f32 %v803, %v838
      %v871 = vadd.f32 %v804, %v839
      %v872 = vadd.f32 %v805, %v840
      %v873 = vadd.f32 %v806, %v841
      %v874 = vadd.f32 %v807, %v842
      %v875 = vadd.f32 %v808, %v843
      %v876 = vadd.f32 %v809, %v844
      %v877 = vadd.f32 %v810, %v845
      %v878 = vadd.f32 %v811, %v846
      %v879 = vadd.f32 %v812, %v847
      %v880 = vadd.f32 %v813, %v848
      %v881 = vadd.f32 %v814, %v849
      %v882 = vld [vmem:[#allocation2 + $0x130] sm:$0xff]
      %v883 = vld [vmem:[#allocation2 + $0x138] sm:$0xff]
      %v884 = vperm.slane %v613, 4
      %v885 = vmul.f32 %v624, %v884
      %v886 = vmul.f32 %v625, %v884
      %v887 = vmul.f32 %v626, %v884
      %v888 = vmul.f32 %v627, %v884
      %v889 = vmul.f32 %v628, %v884
      %v890 = vmul.f32 %v629, %v884
      %v891 = vmul.f32 %v630, %v884
      %v892 = vmul.f32 %v631, %v884
      %v893 = vmul.f32 %v632, %v884
      %v894 = vmul.f32 %v633, %v884
      %v895 = vmul.f32 %v634, %v884
      %v896 = vmul.f32 %v635, %v884
      %v897 = vmul.f32 %v636, %v884
      %v898 = vmul.f32 %v637, %v884
      %v899 = vmul.f32 %v638, %v884
      %v900 = vmul.f32 %v639, %v884
      %v901 = vmul.f32 %v640, %v884
      %v902 = vmul.f32 %v641, %v884
      %v903 = vmul.f32 %v642, %v884
      %v904 = vmul.f32 %v643, %v884
      %v905 = vmul.f32 %v644, %v884
      %v906 = vmul.f32 %v645, %v884
      %v907 = vmul.f32 %v646, %v884
      %v908 = vmul.f32 %v647, %v884
      %v909 = vmul.f32 %v681, %v884
      %v910 = vmul.f32 %v682, %v884
      %v911 = vmul.f32 %v748, %v884
      %v912 = vmul.f32 %v749, %v884
      %v913 = vmul.f32 %v815, %v884
      %v914 = vmul.f32 %v816, %v884
      %v915 = vmul.f32 %v882, %v884
      %v916 = vmul.f32 %v883, %v884
      %v917 = vadd.f32 %v850, %v885
      %v918 = vadd.f32 %v851, %v886
      %v919 = vadd.f32 %v852, %v887
      %v920 = vadd.f32 %v853, %v888
      %v921 = vadd.f32 %v854, %v889
      %v922 = vadd.f32 %v855, %v890
      %v923 = vadd.f32 %v856, %v891
      %v924 = vadd.f32 %v857, %v892
      %v925 = vadd.f32 %v858, %v893
      %v926 = vadd.f32 %v859, %v894
      %v927 = vadd.f32 %v860, %v895
      %v928 = vadd.f32 %v861, %v896
      %v929 = vadd.f32 %v862, %v897
      %v930 = vadd.f32 %v863, %v898
      %v931 = vadd.f32 %v864, %v899
      %v932 = vadd.f32 %v865, %v900
      %v933 = vadd.f32 %v866, %v901
      %v934 = vadd.f32 %v867, %v902
      %v935 = vadd.f32 %v868, %v903
      %v936 = vadd.f32 %v869, %v904
      %v937 = vadd.f32 %v870, %v905
      %v938 = vadd.f32 %v871, %v906
      %v939 = vadd.f32 %v872, %v907
      %v940 = vadd.f32 %v873, %v908
      %v941 = vadd.f32 %v874, %v909
      %v942 = vadd.f32 %v875, %v910
      %v943 = vadd.f32 %v876, %v911
      %v944 = vadd.f32 %v877, %v912
      %v945 = vadd.f32 %v878, %v913
      %v946 = vadd.f32 %v879, %v914
      %v947 = vadd.f32 %v880, %v915
      %v948 = vadd.f32 %v881, %v916
      %v949 = vld [vmem:[#allocation2 + $0x140] sm:$0xff]
      %v950 = vld [vmem:[#allocation2 + $0x148] sm:$0xff]
      %v951 = vperm.slane %v613, 5
      %v952 = vmul.f32 %v626, %v951
      %v953 = vmul.f32 %v627, %v951
      %v954 = vmul.f32 %v628, %v951
      %v955 = vmul.f32 %v629, %v951
      %v956 = vmul.f32 %v630, %v951
      %v957 = vmul.f32 %v631, %v951
      %v958 = vmul.f32 %v632, %v951
      %v959 = vmul.f32 %v633, %v951
      %v960 = vmul.f32 %v634, %v951
      %v961 = vmul.f32 %v635, %v951
      %v962 = vmul.f32 %v636, %v951
      %v963 = vmul.f32 %v637, %v951
      %v964 = vmul.f32 %v638, %v951
      %v965 = vmul.f32 %v639, %v951
      %v966 = vmul.f32 %v640, %v951
      %v967 = vmul.f32 %v641, %v951
      %v968 = vmul.f32 %v642, %v951
      %v969 = vmul.f32 %v643, %v951
      %v970 = vmul.f32 %v644, %v951
      %v971 = vmul.f32 %v645, %v951
      %v972 = vmul.f32 %v646, %v951
      %v973 = vmul.f32 %v647, %v951
      %v974 = vmul.f32 %v681, %v951
      %v975 = vmul.f32 %v682, %v951
      %v976 = vmul.f32 %v748, %v951
      %v977 = vmul.f32 %v749, %v951
      %v978 = vmul.f32 %v815, %v951
      %v979 = vmul.f32 %v816, %v951
      %v980 = vmul.f32 %v882, %v951
      %v981 = vmul.f32 %v883, %v951
      %v982 = vmul.f32 %v949, %v951
      %v983 = vmul.f32 %v950, %v951
      %v984 = vadd.f32 %v917, %v952
      %v985 = vadd.f32 %v918, %v953
      %v986 = vadd.f32 %v919, %v954
      %v987 = vadd.f32 %v920, %v955
      %v988 = vadd.f32 %v921, %v956
      %v989 = vadd.f32 %v922, %v957
      %v990 = vadd.f32 %v923, %v958
      %v991 = vadd.f32 %v924, %v959
      %v992 = vadd.f32 %v925, %v960
      %v993 = vadd.f32 %v926, %v961
      %v994 = vadd.f32 %v927, %v962
      %v995 = vadd.f32 %v928, %v963
      %v996 = vadd.f32 %v929, %v964
      %v997 = vadd.f32 %v930, %v965
      %v998 = vadd.f32 %v931, %v966
      %v999 = vadd.f32 %v932, %v967
      %v1000 = vadd.f32 %v933, %v968
      %v1001 = vadd.f32 %v934, %v969
      %v1002 = vadd.f32 %v935, %v970
      %v1003 = vadd.f32 %v936, %v971
      %v1004 = vadd.f32 %v937, %v972
      %v1005 = vadd.f32 %v938, %v973
      %v1006 = vadd.f32 %v939, %v974
      %v1007 = vadd.f32 %v940, %v975
      %v1008 = vadd.f32 %v941, %v976
      %v1009 = vadd.f32 %v942, %v977
      %v1010 = vadd.f32 %v943, %v978
      %v1011 = vadd.f32 %v944, %v979
      %v1012 = vadd.f32 %v945, %v980
      %v1013 = vadd.f32 %v946, %v981
      %v1014 = vadd.f32 %v947, %v982
      %v1015 = vadd.f32 %v948, %v983
      %v1016 = vld [vmem:[#allocation2 + $0x150] sm:$0xff]
      %v1017 = vld [vmem:[#allocation2 + $0x158] sm:$0xff]
      %v1018 = vperm.slane %v613, 6
      %v1019 = vmul.f32 %v628, %v1018
      %v1020 = vmul.f32 %v629, %v1018
      %v1021 = vmul.f32 %v630, %v1018
      %v1022 = vmul.f32 %v631, %v1018
      %v1023 = vmul.f32 %v632, %v1018
      %v1024 = vmul.f32 %v633, %v1018
      %v1025 = vmul.f32 %v634, %v1018
      %v1026 = vmul.f32 %v635, %v1018
      %v1027 = vmul.f32 %v636, %v1018
      %v1028 = vmul.f32 %v637, %v1018
      %v1029 = vmul.f32 %v638, %v1018
      %v1030 = vmul.f32 %v639, %v1018
      %v1031 = vmul.f32 %v640, %v1018
      %v1032 = vmul.f32 %v641, %v1018
      %v1033 = vmul.f32 %v642, %v1018
      %v1034 = vmul.f32 %v643, %v1018
      %v1035 = vmul.f32 %v644, %v1018
      %v1036 = vmul.f32 %v645, %v1018
      %v1037 = vmul.f32 %v646, %v1018
      %v1038 = vmul.f32 %v647, %v1018
      %v1039 = vmul.f32 %v681, %v1018
      %v1040 = vmul.f32 %v682, %v1018
      %v1041 = vmul.f32 %v748, %v1018
      %v1042 = vmul.f32 %v749, %v1018
      %v1043 = vmul.f32 %v815, %v1018
      %v1044 = vmul.f32 %v816, %v1018
      %v1045 = vmul.f32 %v882, %v1018
      %v1046 = vmul.f32 %v883, %v1018
      %v1047 = vmul.f32 %v949, %v1018
      %v1048 = vmul.f32 %v950, %v1018
      %v1049 = vmul.f32 %v1016, %v1018
      %v1050 = vmul.f32 %v1017, %v1018
      %v1051 = vadd.f32 %v984, %v1019
      %v1052 = vadd.f32 %v985, %v1020
      %v1053 = vadd.f32 %v986, %v1021
      %v1054 = vadd.f32 %v987, %v1022
      %v1055 = vadd.f32 %v988, %v1023
      %v1056 = vadd.f32 %v989, %v1024
      %v1057 = vadd.f32 %v990, %v1025
      %v1058 = vadd.f32 %v991, %v1026
      %v1059 = vadd.f32 %v992, %v1027
      %v1060 = vadd.f32 %v993, %v1028
      %v1061 = vadd.f32 %v994, %v1029
      %v1062 = vadd.f32 %v995, %v1030
      %v1063 = vadd.f32 %v996, %v1031
      %v1064 = vadd.f32 %v997, %v1032
      %v1065 = vadd.f32 %v998, %v1033
      %v1066 = vadd.f32 %v999, %v1034
      %v1067 = vadd.f32 %v1000, %v1035
      %v1068 = vadd.f32 %v1001, %v1036
      %v1069 = vadd.f32 %v1002, %v1037
      %v1070 = vadd.f32 %v1003, %v1038
      %v1071 = vadd.f32 %v1004, %v1039
      %v1072 = vadd.f32 %v1005, %v1040
      %v1073 = vadd.f32 %v1006, %v1041
      %v1074 = vadd.f32 %v1007, %v1042
      %v1075 = vadd.f32 %v1008, %v1043
      %v1076 = vadd.f32 %v1009, %v1044
      %v1077 = vadd.f32 %v1010, %v1045
      %v1078 = vadd.f32 %v1011, %v1046
      %v1079 = vadd.f32 %v1012, %v1047
      %v1080 = vadd.f32 %v1013, %v1048
      %v1081 = vadd.f32 %v1014, %v1049
      %v1082 = vadd.f32 %v1015, %v1050
      %v1083 = vld [vmem:[#allocation2 + $0x160] sm:$0xff]
      %v1084 = vld [vmem:[#allocation2 + $0x168] sm:$0xff]
      %v1085 = vperm.slane %v613, 7
      %v1086 = vmul.f32 %v630, %v1085
      %v1087 = vmul.f32 %v631, %v1085
      %v1088 = vmul.f32 %v632, %v1085
      %v1089 = vmul.f32 %v633, %v1085
      %v1090 = vmul.f32 %v634, %v1085
      %v1091 = vmul.f32 %v635, %v1085
      %v1092 = vmul.f32 %v636, %v1085
      %v1093 = vmul.f32 %v637, %v1085
      %v1094 = vmul.f32 %v638, %v1085
      %v1095 = vmul.f32 %v639, %v1085
      %v1096 = vmul.f32 %v640, %v1085
      %v1097 = vmul.f32 %v641, %v1085
      %v1098 = vmul.f32 %v642, %v1085
      %v1099 = vmul.f32 %v643, %v1085
      %v1100 = vmul.f32 %v644, %v1085
      %v1101 = vmul.f32 %v645, %v1085
      %v1102 = vmul.f32 %v646, %v1085
      %v1103 = vmul.f32 %v647, %v1085
      %v1104 = vmul.f32 %v681, %v1085
      %v1105 = vmul.f32 %v682, %v1085
      %v1106 = vmul.f32 %v748, %v1085
      %v1107 = vmul.f32 %v749, %v1085
      %v1108 = vmul.f32 %v815, %v1085
      %v1109 = vmul.f32 %v816, %v1085
      %v1110 = vmul.f32 %v882, %v1085
      %v1111 = vmul.f32 %v883, %v1085
      %v1112 = vmul.f32 %v949, %v1085
      %v1113 = vmul.f32 %v950, %v1085
      %v1114 = vmul.f32 %v1016, %v1085
      %v1115 = vmul.f32 %v1017, %v1085
      %v1116 = vmul.f32 %v1083, %v1085
      %v1117 = vmul.f32 %v1084, %v1085
      %v1118 = vadd.f32 %v1051, %v1086
      %v1119 = vadd.f32 %v1052, %v1087
      %v1120 = vadd.f32 %v1053, %v1088
      %v1121 = vadd.f32 %v1054, %v1089
      %v1122 = vadd.f32 %v1055, %v1090
      %v1123 = vadd.f32 %v1056, %v1091
      %v1124 = vadd.f32 %v1057, %v1092
      %v1125 = vadd.f32 %v1058, %v1093
      %v1126 = vadd.f32 %v1059, %v1094
      %v1127 = vadd.f32 %v1060, %v1095
      %v1128 = vadd.f32 %v1061, %v1096
      %v1129 = vadd.f32 %v1062, %v1097
      %v1130 = vadd.f32 %v1063, %v1098
      %v1131 = vadd.f32 %v1064, %v1099
      %v1132 = vadd.f32 %v1065, %v1100
      %v1133 = vadd.f32 %v1066, %v1101
      %v1134 = vadd.f32 %v1067, %v1102
      %v1135 = vadd.f32 %v1068, %v1103
      %v1136 = vadd.f32 %v1069, %v1104
      %v1137 = vadd.f32 %v1070, %v1105
      %v1138 = vadd.f32 %v1071, %v1106
      %v1139 = vadd.f32 %v1072, %v1107
      %v1140 = vadd.f32 %v1073, %v1108
      %v1141 = vadd.f32 %v1074, %v1109
      %v1142 = vadd.f32 %v1075, %v1110
      %v1143 = vadd.f32 %v1076, %v1111
      %v1144 = vadd.f32 %v1077, %v1112
      %v1145 = vadd.f32 %v1078, %v1113
      %v1146 = vadd.f32 %v1079, %v1114
      %v1147 = vadd.f32 %v1080, %v1115
      %v1148 = vadd.f32 %v1081, %v1116
      %v1149 = vadd.f32 %v1082, %v1117
      %v1150 = vld [vmem:[#allocation2 + $0x170] sm:$0xff]
      %v1151 = vld [vmem:[#allocation2 + $0x178] sm:$0xff]
      %v1152 = vperm.slane %v614, 0
      %v1153 = vmul.f32 %v632, %v1152
      %v1154 = vmul.f32 %v633, %v1152
      %v1155 = vmul.f32 %v634, %v1152
      %v1156 = vmul.f32 %v635, %v1152
      %v1157 = vmul.f32 %v636, %v1152
      %v1158 = vmul.f32 %v637, %v1152
      %v1159 = vmul.f32 %v638, %v1152
      %v1160 = vmul.f32 %v639, %v1152
      %v1161 = vmul.f32 %v640, %v1152
      %v1162 = vmul.f32 %v641, %v1152
      %v1163 = vmul.f32 %v642, %v1152
      %v1164 = vmul.f32 %v643, %v1152
      %v1165 = vmul.f32 %v644, %v1152
      %v1166 = vmul.f32 %v645, %v1152
      %v1167 = vmul.f32 %v646, %v1152
      %v1168 = vmul.f32 %v647, %v1152
      %v1169 = vmul.f32 %v681, %v1152
      %v1170 = vmul.f32 %v682, %v1152
      %v1171 = vmul.f32 %v748, %v1152
      %v1172 = vmul.f32 %v749, %v1152
      %v1173 = vmul.f32 %v815, %v1152
      %v1174 = vmul.f32 %v816, %v1152
      %v1175 = vmul.f32 %v882, %v1152
      %v1176 = vmul.f32 %v883, %v1152
      %v1177 = vmul.f32 %v949, %v1152
      %v1178 = vmul.f32 %v950, %v1152
      %v1179 = vmul.f32 %v1016, %v1152
      %v1180 = vmul.f32 %v1017, %v1152
      %v1181 = vmul.f32 %v1083, %v1152
      %v1182 = vmul.f32 %v1084, %v1152
      %v1183 = vmul.f32 %v1150, %v1152
      %v1184 = vmul.f32 %v1151, %v1152
      %v1185 = vadd.f32 %v1118, %v1153
      %v1186 = vadd.f32 %v1119, %v1154
      %v1187 = vadd.f32 %v1120, %v1155
      %v1188 = vadd.f32 %v1121, %v1156
      %v1189 = vadd.f32 %v1122, %v1157
      %v1190 = vadd.f32 %v1123, %v1158
      %v1191 = vadd.f32 %v1124, %v1159
      %v1192 = vadd.f32 %v1125, %v1160
      %v1193 = vadd.f32 %v1126, %v1161
      %v1194 = vadd.f32 %v1127, %v1162
      %v1195 = vadd.f32 %v1128, %v1163
      %v1196 = vadd.f32 %v1129, %v1164
      %v1197 = vadd.f32 %v1130, %v1165
      %v1198 = vadd.f32 %v1131, %v1166
      %v1199 = vadd.f32 %v1132, %v1167
      %v1200 = vadd.f32 %v1133, %v1168
      %v1201 = vadd.f32 %v1134, %v1169
      %v1202 = vadd.f32 %v1135, %v1170
      %v1203 = vadd.f32 %v1136, %v1171
      %v1204 = vadd.f32 %v1137, %v1172
      %v1205 = vadd.f32 %v1138, %v1173
      %v1206 = vadd.f32 %v1139, %v1174
      %v1207 = vadd.f32 %v1140, %v1175
      %v1208 = vadd.f32 %v1141, %v1176
      %v1209 = vadd.f32 %v1142, %v1177
      %v1210 = vadd.f32 %v1143, %v1178
      %v1211 = vadd.f32 %v1144, %v1179
      %v1212 = vadd.f32 %v1145, %v1180
      %v1213 = vadd.f32 %v1146, %v1181
      %v1214 = vadd.f32 %v1147, %v1182
      %v1215 = vadd.f32 %v1148, %v1183
      %v1216 = vadd.f32 %v1149, %v1184
      %v1218 = vperm.slane %v615, 0
      %v1220 = vadd.f32 %v1185, %v1218
      %v1221 = vadd.f32 %v1186, %v1218
      %v1222 = vadd.f32 %v1187, %v1218
      %v1223 = vadd.f32 %v1188, %v1218
      %v1224 = vadd.f32 %v1189, %v1218
      %v1225 = vadd.f32 %v1190, %v1218
      %v1226 = vadd.f32 %v1191, %v1218
      %v1227 = vadd.f32 %v1192, %v1218
      %v1228 = vadd.f32 %v1193, %v1218
      %v1229 = vadd.f32 %v1194, %v1218
      %v1230 = vadd.f32 %v1195, %v1218
      %v1231 = vadd.f32 %v1196, %v1218
      %v1232 = vadd.f32 %v1197, %v1218
      %v1233 = vadd.f32 %v1198, %v1218
      %v1234 = vadd.f32 %v1199, %v1218
      %v1235 = vadd.f32 %v1200, %v1218
      %v1236 = vadd.f32 %v1201, %v1218
      %v1237 = vadd.f32 %v1202, %v1218
      %v1238 = vadd.f32 %v1203, %v1218
      %v1239 = vadd.f32 %v1204, %v1218
      %v1240 = vadd.f32 %v1205, %v1218
      %v1241 = vadd.f32 %v1206, %v1218
      %v1242 = vadd.f32 %v1207, %v1218
      %v1243 = vadd.f32 %v1208, %v1218
      %v1244 = vadd.f32 %v1209, %v1218
      %v1245 = vadd.f32 %v1210, %v1218
      %v1246 = vadd.f32 %v1211, %v1218
      %v1247 = vadd.f32 %v1212, %v1218
      %v1248 = vadd.f32 %v1213, %v1218
      %v1249 = vadd.f32 %v1214, %v1218
      %v1250 = vadd.f32 %v1215, %v1218
      %v1251 = vadd.f32 %v1216, %v1218
      %v1252 = vmax.f32 %v1220, 0.0
      %v1253 = vmax.f32 %v1221, 0.0
      %v1254 = vmax.f32 %v1222, 0.0
      %v1255 = vmax.f32 %v1223, 0.0
      %v1256 = vmax.f32 %v1224, 0.0
      %v1257 = vmax.f32 %v1225, 0.0
      %v1258 = vmax.f32 %v1226, 0.0
      %v1259 = vmax.f32 %v1227, 0.0
      %v1260 = vmax.f32 %v1228, 0.0
      %v1261 = vmax.f32 %v1229, 0.0
      %v1262 = vmax.f32 %v1230, 0.0
      %v1263 = vmax.f32 %v1231, 0.0
      %v1264 = vmax.f32 %v1232, 0.0
      %v1265 = vmax.f32 %v1233, 0.0
      %v1266 = vmax.f32 %v1234, 0.0
      %v1267 = vmax.f32 %v1235, 0.0
      %v1268 = vmax.f32 %v1236, 0.0
      %v1269 = vmax.f32 %v1237, 0.0
      %v1270 = vmax.f32 %v1238, 0.0
      %v1271 = vmax.f32 %v1239, 0.0
      %v1272 = vmax.f32 %v1240, 0.0
      %v1273 = vmax.f32 %v1241, 0.0
      %v1274 = vmax.f32 %v1242, 0.0
      %v1275 = vmax.f32 %v1243, 0.0
      %v1276 = vmax.f32 %v1244, 0.0
      %v1277 = vmax.f32 %v1245, 0.0
      %v1278 = vmax.f32 %v1246, 0.0
      %v1279 = vmax.f32 %v1247, 0.0
      %v1280 = vmax.f32 %v1248, 0.0
      %v1281 = vmax.f32 %v1249, 0.0
      %v1282 = vmax.f32 %v1250, 0.0
      %v1283 = vmax.f32 %v1251, 0.0
      %v1284 = vld [vmem:[%s5] sm:$0xff]
      %v1285 = vld [vmem:[%s5 + $0x8] sm:$0xff]
      %v1286 = vld [vmem:[%s5 + $0x10] sm:$0xff]
      %v1287 = vld [vmem:[%s5 + $0x18] sm:$0xff]
      %v1288 = vld [vmem:[%s6] sm:$0x1]
      %v1290 = vperm.slane %v1288, 0
      %v1293 = vsel %vm580, %v1252, 0
      %v1296 = vsel %vm580, %v1253, 0
      %v1299 = vsel %vm580, %v1254, 0
      %v1302 = vsel %vm580, %v1255, 0
      %v1305 = vsel %vm580, %v1256, 0
      %v1308 = vsel %vm580, %v1257, 0
      %v1311 = vsel %vm580, %v1258, 0
      %v1314 = vsel %vm580, %v1259, 0
      %v1317 = vsel %vm580, %v1260, 0
      %v1320 = vsel %vm580, %v1261, 0
      %v1323 = vsel %vm580, %v1262, 0
      %v1326 = vsel %vm580, %v1263, 0
      %v1329 = vsel %vm580, %v1264, 0
      %v1332 = vsel %vm580, %v1265, 0
      %v1335 = vsel %vm580, %v1266, 0
      %v1338 = vsel %vm580, %v1267, 0
      %v1341 = vsel %vm580, %v1268, 0
      %v1344 = vsel %vm580, %v1269, 0
      %v1347 = vsel %vm580, %v1270, 0
      %v1350 = vsel %vm580, %v1271, 0
      %v1353 = vsel %vm580, %v1272, 0
      %v1356 = vsel %vm580, %v1273, 0
      %v1359 = vsel %vm580, %v1274, 0
      %v1362 = vsel %vm580, %v1275, 0
      %v1365 = vsel %vm580, %v1276, 0
      %v1368 = vsel %vm580, %v1277, 0
      %v1371 = vsel %vm580, %v1278, 0
      %v1374 = vsel %vm580, %v1279, 0
      %v1377 = vsel %vm580, %v1280, 0
      %v1380 = vsel %vm580, %v1281, 0
      %v1383 = vsel %vm580, %v1282, 0
      %v1386 = vsel %vm580, %v1283, 0
      %1388 = vmatpush.msra.mxu0 0.0
      %1389 = vmatpush.msra.mxu0 0.0
      %1390 = vmatpush.msra.mxu0 0.0
      %1391 = vmatpush.msra.mxu0 0.0
      %1392 = vmatpush.msra.mxu0 0.0
      %1393 = vmatpush.msra.mxu0 0.0
      %1394 = vmatpush.msra.mxu0 0.0
      %1395 = vmatpush.msra.mxu0 0.0
      %1396 = vmatpush.msra.mxu0 0.0
      %1397 = vmatpush.msra.mxu0 0.0
      %1398 = vmatpush.msra.mxu0 0.0
      %1399 = vmatpush.msra.mxu0 0.0
      %1400 = vmatpush.msra.mxu0 %v1287
      %1401 = vmatpush.msra.mxu0 %v1286
      %1402 = vmatpush.msra.mxu0 %v1285
      %1403 = vmatpush.msra.mxu0 %v1284
      %1404 = vmatmul.f32.gmra.mxu0 %v1293
      %v1405 = vpop.f32.mrf.mxu0
      %v1406 = vadd.f32 %v1290, %v1405
      %1407 = vmatmul.f32.gmra.mxu0 %v1296
      %v1408 = vpop.f32.mrf.mxu0
      %v1409 = vadd.f32 %v1290, %v1408
      %1410 = vmatmul.f32.gmra.mxu0 %v1299
      %v1411 = vpop.f32.mrf.mxu0
      %v1412 = vadd.f32 %v1290, %v1411
      %1413 = vmatmul.f32.gmra.mxu0 %v1302
      %v1414 = vpop.f32.mrf.mxu0
      %v1415 = vadd.f32 %v1290, %v1414
      %1416 = vmatmul.f32.gmra.mxu0 %v1305
      %v1417 = vpop.f32.mrf.mxu0
      %v1418 = vadd.f32 %v1290, %v1417
      %1419 = vmatmul.f32.gmra.mxu0 %v1308
      %v1420 = vpop.f32.mrf.mxu0
      %v1421 = vadd.f32 %v1290, %v1420
      %1422 = vmatmul.f32.gmra.mxu0 %v1311
      %v1423 = vpop.f32.mrf.mxu0
      %v1424 = vadd.f32 %v1290, %v1423
      %1425 = vmatmul.f32.gmra.mxu0 %v1314
      %v1426 = vpop.f32.mrf.mxu0
      %v1427 = vadd.f32 %v1290, %v1426
      %1428 = vmatmul.f32.gmra.mxu0 %v1317
      %v1429 = vpop.f32.mrf.mxu0
      %v1430 = vadd.f32 %v1290, %v1429
      %1431 = vmatmul.f32.gmra.mxu0 %v1320
      %v1432 = vpop.f32.mrf.mxu0
      %v1433 = vadd.f32 %v1290, %v1432
      %1434 = vmatmul.f32.gmra.mxu0 %v1323
      %v1435 = vpop.f32.mrf.mxu0
      %v1436 = vadd.f32 %v1290, %v1435
      %1437 = vmatmul.f32.gmra.mxu0 %v1326
      %v1438 = vpop.f32.mrf.mxu0
      %v1439 = vadd.f32 %v1290, %v1438
      %1440 = vmatmul.f32.gmra.mxu0 %v1329
      %v1441 = vpop.f32.mrf.mxu0
      %v1442 = vadd.f32 %v1290, %v1441
      %1443 = vmatmul.f32.gmra.mxu0 %v1332
      %v1444 = vpop.f32.mrf.mxu0
      %v1445 = vadd.f32 %v1290, %v1444
      %1446 = vmatmul.f32.gmra.mxu0 %v1335
      %v1447 = vpop.f32.mrf.mxu0
      %v1448 = vadd.f32 %v1290, %v1447
      %1449 = vmatmul.f32.gmra.mxu0 %v1338
      %v1450 = vpop.f32.mrf.mxu0
      %v1451 = vadd.f32 %v1290, %v1450
      %1452 = vmatmul.f32.gmra.mxu0 %v1341
      %v1453 = vpop.f32.mrf.mxu0
      %v1454 = vadd.f32 %v1290, %v1453
      %1455 = vmatmul.f32.gmra.mxu0 %v1344
      %v1456 = vpop.f32.mrf.mxu0
      %v1457 = vadd.f32 %v1290, %v1456
      %1458 = vmatmul.f32.gmra.mxu0 %v1347
      %v1459 = vpop.f32.mrf.mxu0
      %v1460 = vadd.f32 %v1290, %v1459
      %1461 = vmatmul.f32.gmra.mxu0 %v1350
      %v1462 = vpop.f32.mrf.mxu0
      %v1463 = vadd.f32 %v1290, %v1462
      %1464 = vmatmul.f32.gmra.mxu0 %v1353
      %v1465 = vpop.f32.mrf.mxu0
      %v1466 = vadd.f32 %v1290, %v1465
      %1467 = vmatmul.f32.gmra.mxu0 %v1356
      %v1468 = vpop.f32.mrf.mxu0
      %v1469 = vadd.f32 %v1290, %v1468
      %1470 = vmatmul.f32.gmra.mxu0 %v1359
      %v1471 = vpop.f32.mrf.mxu0
      %v1472 = vadd.f32 %v1290, %v1471
      %1473 = vmatmul.f32.gmra.mxu0 %v1362
      %v1474 = vpop.f32.mrf.mxu0
      %v1475 = vadd.f32 %v1290, %v1474
      %1476 = vmatmul.f32.gmra.mxu0 %v1365
      %v1477 = vpop.f32.mrf.mxu0
      %v1478 = vadd.f32 %v1290, %v1477
      %1479 = vmatmul.f32.gmra.mxu0 %v1368
      %v1480 = vpop.f32.mrf.mxu0
      %v1481 = vadd.f32 %v1290, %v1480
      %1482 = vmatmul.f32.gmra.mxu0 %v1371
      %v1483 = vpop.f32.mrf.mxu0
      %v1484 = vadd.f32 %v1290, %v1483
      %1485 = vmatmul.f32.gmra.mxu0 %v1374
      %v1486 = vpop.f32.mrf.mxu0
      %v1487 = vadd.f32 %v1290, %v1486
      %1488 = vmatmul.f32.gmra.mxu0 %v1377
      %v1489 = vpop.f32.mrf.mxu0
      %v1490 = vadd.f32 %v1290, %v1489
      %1491 = vmatmul.f32.gmra.mxu0 %v1380
      %v1492 = vpop.f32.mrf.mxu0
      %v1493 = vadd.f32 %v1290, %v1492
      %1494 = vmatmul.f32.gmra.mxu0 %v1383
      %v1495 = vpop.f32.mrf.mxu0
      %v1496 = vadd.f32 %v1290, %v1495
      %1497 = vmatmul.f32.gmra.mxu0 %v1386
      %v1498 = vpop.f32.mrf.mxu0
      %v1499 = vadd.f32 %v1290, %v1498
      %1500 = vdwg.mxu0
      %v1501 = vld [vmem:[%s273] sm:$0xff]
      %v1502 = vld [vmem:[%s273 + $0x8] sm:$0xff]
      %v1503 = vld [vmem:[%s273 + $0x10] sm:$0xff]
      %v1504 = vld [vmem:[%s273 + $0x18] sm:$0xff]
      %v1505 = vld [vmem:[%s273 + $0x20] sm:$0xff]
      %v1506 = vld [vmem:[%s273 + $0x28] sm:$0xff]
      %v1507 = vld [vmem:[%s273 + $0x30] sm:$0xff]
      %v1508 = vld [vmem:[%s273 + $0x38] sm:$0xff]
      %v1509 = vld [vmem:[%s273 + $0x40] sm:$0xff]
      %v1510 = vld [vmem:[%s273 + $0x48] sm:$0xff]
      %v1511 = vld [vmem:[%s273 + $0x50] sm:$0xff]
      %v1512 = vld [vmem:[%s273 + $0x58] sm:$0xff]
      %v1513 = vld [vmem:[%s273 + $0x60] sm:$0xff]
      %v1514 = vld [vmem:[%s273 + $0x68] sm:$0xff]
      %v1515 = vld [vmem:[%s273 + $0x70] sm:$0xff]
      %v1516 = vld [vmem:[%s273 + $0x78] sm:$0xff]
      %v1517 = vld [vmem:[%s273 + $0x80] sm:$0xff]
      %v1518 = vld [vmem:[%s273 + $0x88] sm:$0xff]
      %v1519 = vld [vmem:[%s273 + $0x90] sm:$0xff]
      %v1520 = vld [vmem:[%s273 + $0x98] sm:$0xff]
      %v1521 = vld [vmem:[%s273 + $0xa0] sm:$0xff]
      %v1522 = vld [vmem:[%s273 + $0xa8] sm:$0xff]
      %v1523 = vld [vmem:[%s273 + $0xb0] sm:$0xff]
      %v1524 = vld [vmem:[%s273 + $0xb8] sm:$0xff]
      %v1525 = vld [vmem:[%s273 + $0xc0] sm:$0xff]
      %v1526 = vld [vmem:[%s273 + $0xc8] sm:$0xff]
      %v1527 = vld [vmem:[%s273 + $0xd0] sm:$0xff]
      %v1528 = vld [vmem:[%s273 + $0xd8] sm:$0xff]
      %v1529 = vld [vmem:[%s273 + $0xe0] sm:$0xff]
      %v1530 = vld [vmem:[%s273 + $0xe8] sm:$0xff]
      %v1531 = vld [vmem:[%s273 + $0xf0] sm:$0xff]
      %v1532 = vld [vmem:[%s273 + $0xf8] sm:$0xff]
      %v1533 = vadd.f32 %v1406, %v1501
      %v1534 = vadd.f32 %v1409, %v1502
      %v1535 = vadd.f32 %v1412, %v1503
      %v1536 = vadd.f32 %v1415, %v1504
      %v1537 = vadd.f32 %v1418, %v1505
      %v1538 = vadd.f32 %v1421, %v1506
      %v1539 = vadd.f32 %v1424, %v1507
      %v1540 = vadd.f32 %v1427, %v1508
      %v1541 = vadd.f32 %v1430, %v1509
      %v1542 = vadd.f32 %v1433, %v1510
      %v1543 = vadd.f32 %v1436, %v1511
      %v1544 = vadd.f32 %v1439, %v1512
      %v1545 = vadd.f32 %v1442, %v1513
      %v1546 = vadd.f32 %v1445, %v1514
      %v1547 = vadd.f32 %v1448, %v1515
      %v1548 = vadd.f32 %v1451, %v1516
      %v1549 = vadd.f32 %v1454, %v1517
      %v1550 = vadd.f32 %v1457, %v1518
      %v1551 = vadd.f32 %v1460, %v1519
      %v1552 = vadd.f32 %v1463, %v1520
      %v1553 = vadd.f32 %v1466, %v1521
      %v1554 = vadd.f32 %v1469, %v1522
      %v1555 = vadd.f32 %v1472, %v1523
      %v1556 = vadd.f32 %v1475, %v1524
      %v1557 = vadd.f32 %v1478, %v1525
      %v1558 = vadd.f32 %v1481, %v1526
      %v1559 = vadd.f32 %v1484, %v1527
      %v1560 = vadd.f32 %v1487, %v1528
      %v1561 = vadd.f32 %v1490, %v1529
      %v1562 = vadd.f32 %v1493, %v1530
      %v1563 = vadd.f32 %v1496, %v1531
      %v1564 = vadd.f32 %v1499, %v1532
      %1565 = vst.msk [vmem:[%s278] sm:$0xff] %vm338, %v1533
      %1566 = vst.msk [vmem:[%s278 + $0x8] sm:$0xff] %vm338, %v1534
      %1567 = vst.msk [vmem:[%s278 + $0x10] sm:$0xff] %vm338, %v1535
      %1568 = vst.msk [vmem:[%s278 + $0x18] sm:$0xff] %vm338, %v1536
      %1569 = vst.msk [vmem:[%s278 + $0x20] sm:$0xff] %vm338, %v1537
      %1570 = vst.msk [vmem:[%s278 + $0x28] sm:$0xff] %vm338, %v1538
      %1571 = vst.msk [vmem:[%s278 + $0x30] sm:$0xff] %vm338, %v1539
      %1572 = vst.msk [vmem:[%s278 + $0x38] sm:$0xff] %vm338, %v1540
      %1573 = vst.msk [vmem:[%s278 + $0x40] sm:$0xff] %vm338, %v1541
      %1574 = vst.msk [vmem:[%s278 + $0x48] sm:$0xff] %vm338, %v1542
      %1575 = vst.msk [vmem:[%s278 + $0x50] sm:$0xff] %vm338, %v1543
      %1576 = vst.msk [vmem:[%s278 + $0x58] sm:$0xff] %vm338, %v1544
      %1577 = vst.msk [vmem:[%s278 + $0x60] sm:$0xff] %vm338, %v1545
      %1578 = vst.msk [vmem:[%s278 + $0x68] sm:$0xff] %vm338, %v1546
      %1579 = vst.msk [vmem:[%s278 + $0x70] sm:$0xff] %vm338, %v1547
      %1580 = vst.msk [vmem:[%s278 + $0x78] sm:$0xff] %vm338, %v1548
      %1581 = vst.msk [vmem:[%s278 + $0x80] sm:$0xff] %vm338, %v1549
      %1582 = vst.msk [vmem:[%s278 + $0x88] sm:$0xff] %vm338, %v1550
      %1583 = vst.msk [vmem:[%s278 + $0x90] sm:$0xff] %vm338, %v1551
      %1584 = vst.msk [vmem:[%s278 + $0x98] sm:$0xff] %vm338, %v1552
      %1585 = vst.msk [vmem:[%s278 + $0xa0] sm:$0xff] %vm338, %v1553
      %1586 = vst.msk [vmem:[%s278 + $0xa8] sm:$0xff] %vm338, %v1554
      %1587 = vst.msk [vmem:[%s278 + $0xb0] sm:$0xff] %vm338, %v1555
      %1588 = vst.msk [vmem:[%s278 + $0xb8] sm:$0xff] %vm338, %v1556
      %1589 = vst.msk [vmem:[%s278 + $0xc0] sm:$0xff] %vm338, %v1557
      %1590 = vst.msk [vmem:[%s278 + $0xc8] sm:$0xff] %vm338, %v1558
      %1591 = vst.msk [vmem:[%s278 + $0xd0] sm:$0xff] %vm338, %v1559
      %1592 = vst.msk [vmem:[%s278 + $0xd8] sm:$0xff] %vm338, %v1560
      %1593 = vst.msk [vmem:[%s278 + $0xe0] sm:$0xff] %vm338, %v1561
      %1594 = vst.msk [vmem:[%s278 + $0xe8] sm:$0xff] %vm338, %v1562
      %1595 = vst.msk [vmem:[%s278 + $0xf0] sm:$0xff] %vm338, %v1563
      %1596 = vst.msk [vmem:[%s278 + $0xf8] sm:$0xff] %vm338, %v1564
      %p1597 = scmp.lt.s32.totalorder %s18, 1
      %s1598 = scalar_select %p1597, %s18, 1
      %s1599 = smul.addr %s1598, 32
      %s1600 = smul.addr %s1599, 8
      %s1601 = scalar_lea.vmem %s7, %s1600
      // Predicated region
      $region53: #{tpu_custom_call.1} parent=47 // pred_check
        %p1602 = pneg %p188
      $region54: #{tpu_custom_call.1} parent=47 // pred_check_branch
        %1604 = sbr.rel (%p1602) target = $region56
      $region55: #{tpu_custom_call.1} parent=47 // pred_region
        _
      $region56: #{tpu_custom_call.1} parent=47 // pred_fallthru
        _
    $region48: #{tpu_custom_call.1} parent=5 // pred_fallthru
      _
    %p1605 = scmp.le.s32.totalorder 2, %s13
    // Predicated region
    $region57: #{tpu_custom_call.1} parent=5 // pred_check
      %p1606 = pneg %p1605
    $region58: #{tpu_custom_call.1} parent=5 // pred_check_branch
      %1608 = sbr.rel (%p1606) target = $region60
    $region59: #{tpu_custom_call.1} parent=5 // pred_region
      %s1609 = ssub.s32 %s13, 2
      // Predicated region
      $region61: #{tpu_custom_call.1} parent=59 // pred_check
        %p1610 = pneg %p194
      $region62: #{tpu_custom_call.1} parent=59 // pred_check_branch
        %1612 = sbr.rel (%p1610) target = $region64
      $region63: #{tpu_custom_call.1} parent=59 // pred_region
        %p1613 = scmp.lt.s32.totalorder %s19, 1
        %s1614 = scalar_select %p1613, %s19, 1
        %s1615 = smul.addr %s1614, 32
        %s1616 = smul.addr %s1615, 8
        %s1617 = scalar_lea.vmem %s7, %s1616
      $region64: #{tpu_custom_call.1} parent=59 // pred_fallthru
        _
    $region60: #{tpu_custom_call.1} parent=5 // pred_fallthru
      _
  $region6: #{tpu_custom_call.1} parent=0 // loop_footer
    %s17 = sadd.s32 1, %s13
  $region7: #{tpu_custom_call.1} parent=0 // loop_footer_branch
    %12 = sbr.rel target = $region3
  $region8: #{tpu_custom_call.1} parent=0 // loop_exit
    _

</llo_original>
